<compile_context>
chip_gen: v5e
topology: v5e:2x2
jax: 0.10.0
libtpu: 0.0.40
codegen_flags: <defaults>
</compile_context>

<pallas_src>
import math
import numpy as np
import jax
import jax.numpy as jnp
from jax import lax
from jax.experimental import pallas as pl
from jax.experimental.pallas import tpu as pltpu

# ---- config (the `args` Namespace of the PyTorch module) -----------------
D_MODEL     = 16
HEAD_DIMS   = [[0, 1, 2, 3], [4, 5, 6, 7]]          # contiguous -> dim_size = 8
N_HIDDEN    = 32
CHANNELS    = [8, 8]
KERNELS     = [3, 5]
STRIDES     = [1, 2]
PADDINGS    = [1, 2]
DIM_FORWARD = 32
DIM_OUTPUT  = 4
BATCH       = 2
SEQ         = 8
EPS_LN      = 1e-5
EPS_BN      = 1e-5

DIM_SIZE  = sum(len(d) for d in HEAD_DIMS)                     # 8
DH        = DIM_SIZE // len(HEAD_DIMS)                         # 4 (per head)
LOUTS     = [(SEQ + 2 * p - k) // s + 1
             for k, s, p in zip(KERNELS, STRIDES, PADDINGS)]   # [8, 4]
L_TOTAL   = sum(LOUTS)                                         # 12
CONV_FEAT = CHANNELS[0] * L_TOTAL                              # 96
FEAT_DIM  = 2 * N_HIDDEN + CONV_FEAT                           # 160
LANES     = 128
OUT_PAD   = 128                                                # lane-dense output

# ---- packed f32 parameter buffer layout (rows x 128 lanes) ----------------
R_WQKV, R_BQKV, R_WO, R_BO, R_LNG, R_LNB = 0, 8, 16, 24, 32, 40
R_BF, R_BB, R_CONVB, R_B1, R_B2, R_W2    = 48, 56, 64, 72, 80, 88
NROWS_F32 = 120                                                # 88 + 32

# ---- packed bf16 parameter buffer layout (rows x 128 lanes) ---------------
R_WHF, R_WIF, R_WIB, R_CONVA, R_W1H, R_W1C = 0, 32, 48, 64, 192, 256
NROWS_B16 = 352                                                # 256 + 96


# ---- the single fused kernel ------------------------------------------------
def fused_forward_kernel(x_ref, x2d_ref, wf_ref, wb_ref, o_ref):
    B, T, D = x_ref.shape
    H = N_HIDDEN
    x = x_ref[...]                                             # (B, T, 16) f32

    # --- static slices into the two packed weight buffers (f32 / bf16) ------
    wqkv   = wf_ref[R_WQKV:R_WQKV + DIM_SIZE, 0:3 * DIM_SIZE]  # (8, 24), Q pre-scaled
    bqkv   = wf_ref[R_BQKV:R_BQKV + 1, 0:3 * DIM_SIZE]         # (1, 24)
    wo_t   = wf_ref[R_WO:R_WO + DIM_SIZE, 0:D_MODEL]           # (8, 16)
    bo     = wf_ref[R_BO:R_BO + 1, 0:D_MODEL]
    ln_g   = wf_ref[R_LNG:R_LNG + 1, 0:D_MODEL]
    ln_b   = wf_ref[R_LNB:R_LNB + 1, 0:D_MODEL]
    b_f    = wf_ref[R_BF:R_BF + 1, :]                          # (1, 128)
    b_b    = wf_ref[R_BB:R_BB + 1, :]                          # (1, 128)
    conv_b = wf_ref[R_CONVB:R_CONVB + 1, 0:CONV_FEAT]          # (1, 96)
    b1     = wf_ref[R_B1:R_B1 + 1, 0:DIM_FORWARD]              # (1, 32)
    b2     = wf_ref[R_B2:R_B2 + 1, :]                          # (1, 128) padded
    w2     = wf_ref[R_W2:R_W2 + DIM_FORWARD, :]                # (32, 128) padded

    whf    = wb_ref[R_WHF:R_WHF + H, :]                        # (32, 128) bf16
    wi_f   = wb_ref[R_WIF:R_WIF + D_MODEL, :]                  # (16, 128) bf16
    wi_b   = wb_ref[R_WIB:R_WIB + D_MODEL, :]                  # (16, 128) bf16
    conv_A = wb_ref[R_CONVA:R_CONVA + SEQ * D_MODEL, 0:CONV_FEAT]   # (128, 96) bf16
    w1_hf  = wb_ref[R_W1H:R_W1H + H, 0:DIM_FORWARD]            # (32, 32) bf16
    w1_hb  = wb_ref[R_W1H + H:R_W1H + 2 * H, 0:DIM_FORWARD]    # (32, 32) bf16
    w1_c   = wb_ref[R_W1C:R_W1C + CONV_FEAT, 0:DIM_FORWARD]    # (96, 32) bf16

    # --- AssociatedAttention: fused block-diagonal Q/K/V, single softmax -----
    x8f = x[:, :, 0:DIM_SIZE].reshape(B * T, DIM_SIZE)
    qkv = (jnp.dot(x8f, wqkv, preferred_element_type=jnp.float32)
           + bqkv).reshape(B, T, 3 * DIM_SIZE)
    q0 = qkv[:, :, 0:DH]
    q1 = qkv[:, :, DH:2 * DH]
    k0 = qkv[:, :, DIM_SIZE:DIM_SIZE + DH]
    k1 = qkv[:, :, DIM_SIZE + DH:2 * DIM_SIZE]
    v0 = qkv[:, :, 2 * DIM_SIZE:2 * DIM_SIZE + DH]
    v1 = qkv[:, :, 2 * DIM_SIZE + DH:3 * DIM_SIZE]

    # 1/sqrt(d_k) is folded into the Q weights at init.
    s0 = jnp.einsum('bqd,bkd->bqk', q0, k0, preferred_element_type=jnp.float32)
    s1 = jnp.einsum('bqd,bkd->bqk', q1, k1, preferred_element_type=jnp.float32)
    s = jnp.concatenate([s0, s1], axis=0)                      # (2B, T, T) - batch-axis stack
    m = jnp.max(s, axis=-1, keepdims=True)
    e = jnp.exp(s - m)
    denom = jnp.sum(e, axis=-1, keepdims=True)
    p_attn = e * pl.reciprocal(denom, approx=True)             # EUP vrcp, one chain for both heads
    o0 = jnp.einsum('bqk,bkd->bqd', p_attn[0:B], v0, preferred_element_type=jnp.float32)
    o1 = jnp.einsum('bqk,bkd->bqd', p_attn[B:2 * B], v1, preferred_element_type=jnp.float32)

    # --- W_o as two row-blocks (no lane concat) + residual + 1-pass LayerNorm
    proj = (jnp.dot(o0.reshape(B * T, DH), wo_t[0:DH], preferred_element_type=jnp.float32)
            + jnp.dot(o1.reshape(B * T, DH), wo_t[DH:2 * DH], preferred_element_type=jnp.float32)
            + bo).reshape(B, T, D)
    y = x + proj
    sum1 = jnp.sum(y, axis=-1, keepdims=True)
    sum2 = jnp.sum(y * y, axis=-1, keepdims=True)
    mean = sum1 * (1.0 / D)
    var = sum2 * (1.0 / D) - mean * mean
    normed = (y - mean) * lax.rsqrt(var + EPS_LN) * ln_g + ln_b

    # --- bidirectional LSTM, output at last timestep -------------------------
    # Hoisted input projection (fwd direction), bf16 MXU operands, f32 acc.
    nf16 = normed.reshape(B * T, D).astype(jnp.bfloat16)
    gxf = (jnp.dot(nf16, wi_f, preferred_element_type=jnp.float32)
           + b_f).reshape(B, T, 4 * H)

    h = jnp.zeros((B, H), jnp.float32)
    c = jnp.zeros((B, H), jnp.float32)
    for t in range(T):                                         # fully unrolled, T=8
        if t == 0:
            gates = gxf[:, 0, :]                               # h==0 -> skip recurrent matmul
        else:
            gates = gxf[:, t, :] + jnp.dot(h.astype(jnp.bfloat16), whf,
                                           preferred_element_type=jnp.float32)
        sg = jax.nn.sigmoid(gates)                             # f32 EUP
        th = jnp.tanh(gates)
        c = sg[:, H:2 * H] * c + sg[:, 0:H] * th[:, 2 * H:3 * H]
        h = sg[:, 3 * H:4 * H] * jnp.tanh(c)

    # Backward direction: out[:, -1] only needs its first step on x[T-1] from
    # zero state (so W_hh_bwd contributes exactly zero and is not loaded).
    last16 = normed[:, T - 1, :].astype(jnp.bfloat16)
    gb = jnp.dot(last16, wi_b, preferred_element_type=jnp.float32) + b_b
    sgb = jax.nn.sigmoid(gb)
    thb = jnp.tanh(gb)
    c_b = sgb[:, 0:H] * thb[:, 2 * H:3 * H]
    h_b = sgb[:, 3 * H:4 * H] * jnp.tanh(c_b)

    # --- ConvEncoder: Conv1d + BatchNorm1d(eval) folded to one matmul + ReLU --
    conv_feat = jnp.maximum(
        jnp.dot(x2d_ref[...].astype(jnp.bfloat16), conv_A,
                preferred_element_type=jnp.float32) + conv_b, 0.0)   # (B, 96)

    # --- Decoder: W1 split by row-blocks (no 160-wide feature concat) --------
    h1 = jnp.maximum(
        jnp.dot(h.astype(jnp.bfloat16), w1_hf, preferred_element_type=jnp.float32)
        + jnp.dot(h_b.astype(jnp.bfloat16), w1_hb, preferred_element_type=jnp.float32)
        + jnp.dot(conv_feat.astype(jnp.bfloat16), w1_c, preferred_element_type=jnp.float32)
        + b1, 0.0)                                             # (B, 32)

    # W2/b2 are zero-padded to 128 columns -> full-width lane-dense store.
    o_ref[...] = jnp.dot(h1, w2, preferred_element_type=jnp.float32) + b2


# ---- wrapper: one pallas_call, 4 input DMAs, everything resident in VMEM -----
@jax.jit
def emotion_predict_forward(x, wf32, wb16):
    B = x.shape[0]
    # row-major reshape is a free XLA bitcast; gives the conv branch a lane-dense
    # (B, T*D) operand so the in-kernel conv is a single 2-D matmul.
    x2d = x.reshape(B, SEQ * D_MODEL)
    out = pl.pallas_call(
        fused_forward_kernel,
        out_shape=jax.ShapeDtypeStruct((B, OUT_PAD), jnp.float32),
        in_specs=[pl.BlockSpec(memory_space=pltpu.MemorySpace.VMEM)
                  for _ in range(4)],
        out_specs=pl.BlockSpec(memory_space=pltpu.MemorySpace.VMEM),
    )(x, x2d, wf32, wb16)
    return out[:, :DIM_OUTPUT]


# ---- deterministic parameter init + packing ----------------------------------
def init_params(key):
    keys = iter(jax.random.split(key, 64))

    def u(shape, scale=0.2):
        return np.asarray(jax.random.uniform(next(keys), shape, jnp.float32, -scale, scale))

    def block_diag(mats):
        n = sum(m.shape[0] for m in mats)
        out = np.zeros((n, n), np.float32)
        o = 0
        for m in mats:
            d = m.shape[0]
            out[o:o + d, o:o + d] = m
            o += d
        return out

    # Attention: per-head Linear weights (torch (out,in) layout) packed
    # block-diagonally, Q|K|V fused along the output dim, 1/sqrt(d_k) folded
    # into the Q block (weights and bias).
    wq, bq, wk, bk, wv, bv = [], [], [], [], [], []
    for dims in HEAD_DIMS:
        dh = len(dims)
        wq.append(u((dh, dh))); bq.append(u((dh,)))
        wk.append(u((dh, dh))); bk.append(u((dh,)))
        wv.append(u((dh, dh))); bv.append(u((dh,)))
    scale = 1.0 / math.sqrt(DH)
    wq_blk = block_diag(wq) * scale
    wk_blk = block_diag(wk)
    wv_blk = block_diag(wv)
    wqkv = np.concatenate([wq_blk.T, wk_blk.T, wv_blk.T], axis=1)       # (8, 24)
    bqkv = np.concatenate([np.concatenate(bq) * scale,
                           np.concatenate(bk),
                           np.concatenate(bv)])                         # (24,)

    wo = u((D_MODEL, DIM_SIZE))                 # torch Linear(dim_size, d_model).weight
    bo = u((D_MODEL,))
    ln_g = 1.0 + u((D_MODEL,), 0.05)
    ln_b = u((D_MODEL,), 0.05)

    # BiLSTM weights (torch layout, gate order i|f|g|o).
    H = N_HIDDEN
    w_ih_f = u((4 * H, D_MODEL), 0.1); w_hh_f = u((4 * H, H), 0.1)
    b_ih_f = u((4 * H,), 0.1);         b_hh_f = u((4 * H,), 0.1)
    w_ih_b = u((4 * H, D_MODEL), 0.1); _w_hh_b = u((4 * H, H), 0.1)  # provably unused for out[:, -1]
    b_ih_b = u((4 * H,), 0.1);         b_hh_b = u((4 * H,), 0.1)

    # ConvEncoder: fold Conv1d + BatchNorm1d(eval) of both branches into one
    # (T*D, Cout*(L1+L2)) matrix; columns follow torch's cat(dim=-1).view(B,-1)
    # channel-major flatten order.
    conv_A = np.zeros((SEQ * D_MODEL, CONV_FEAT), np.float32)
    conv_bias = np.zeros((CONV_FEAT,), np.float32)
    l_off = 0
    for (cout, kk, ss, pp, lout) in zip(CHANNELS, KERNELS, STRIDES, PADDINGS, LOUTS):
        w  = u((cout, D_MODEL, kk), 0.1)
        cb = u((cout,), 0.1)
        rm = u((cout,), 0.1)
        rv = np.asarray(jax.random.uniform(next(keys), (cout,), jnp.float32, 0.5, 1.5))
        g  = 1.0 + u((cout,), 0.05)
        bt = u((cout,), 0.05)
        a = g / np.sqrt(rv + EPS_BN)                            # BN(eval) scale
        shift = bt - rm * a                                     # BN(eval) shift
        w_fold = w * a[:, None, None]
        b_eff = cb * a + shift
        col_base = np.arange(cout) * L_TOTAL + l_off
        for l in range(lout):
            cols = col_base + l
            conv_bias[cols] = b_eff
            for k_i in range(kk):
                t = l * ss + k_i - pp
                if 0 <= t < SEQ:
                    conv_A[t * D_MODEL:(t + 1) * D_MODEL, cols] += w_fold[:, :, k_i].T
        l_off += lout

    # Decoder (LazyLinear infers 2*n_hidden + C*(L1+L2) = 160).
    w1 = u((FEAT_DIM, DIM_FORWARD), 0.1)
    b1 = u((DIM_FORWARD,), 0.1)
    w2 = u((DIM_FORWARD, DIM_OUTPUT), 0.1)
    b2 = u((DIM_OUTPUT,), 0.1)

    # --- pack into the two 128-lane-padded buffers ---------------------------
    wf = np.zeros((NROWS_F32, LANES), np.float32)
    wf[R_WQKV:R_WQKV + DIM_SIZE, 0:3 * DIM_SIZE] = wqkv
    wf[R_BQKV, 0:3 * DIM_SIZE] = bqkv
    wf[R_WO:R_WO + DIM_SIZE, 0:D_MODEL] = wo.T
    wf[R_BO, 0:D_MODEL] = bo
    wf[R_LNG, 0:D_MODEL] = ln_g
    wf[R_LNB, 0:D_MODEL] = ln_b
    wf[R_BF, 0:4 * H] = b_ih_f + b_hh_f
    wf[R_BB, 0:4 * H] = b_ih_b + b_hh_b
    wf[R_CONVB, 0:CONV_FEAT] = conv_bias
    wf[R_B1, 0:DIM_FORWARD] = b1
    wf[R_B2, 0:DIM_OUTPUT] = b2
    wf[R_W2:R_W2 + DIM_FORWARD, 0:DIM_OUTPUT] = w2

    wb = np.zeros((NROWS_B16, LANES), np.float32)
    wb[R_WHF:R_WHF + H, 0:4 * H] = w_hh_f.T
    wb[R_WIF:R_WIF + D_MODEL, 0:4 * H] = w_ih_f.T
    wb[R_WIB:R_WIB + D_MODEL, 0:4 * H] = w_ih_b.T
    wb[R_CONVA:R_CONVA + SEQ * D_MODEL, 0:CONV_FEAT] = conv_A
    wb[R_W1H:R_W1H + 2 * H, 0:DIM_FORWARD] = w1[0:2 * H]            # h_fwd | h_bwd rows
    wb[R_W1C:R_W1C + CONV_FEAT, 0:DIM_FORWARD] = w1[2 * H:FEAT_DIM]  # conv rows

    return jnp.asarray(wf), jnp.asarray(wb, dtype=jnp.bfloat16)


if __name__ == "__main__":
    key = jax.random.PRNGKey(0)
    k_x, k_p = jax.random.split(key)
    x = jax.random.normal(k_x, (BATCH, SEQ, D_MODEL), jnp.float32)
    wf32, wb16 = init_params(k_p)
    out = emotion_predict_forward(x, wf32, wb16)
    out = jax.block_until_ready(out)
    assert out.shape == (BATCH, DIM_OUTPUT)
    print("KERNEL_OK")
</pallas_src>

<mosaic_0001>
module attributes {stable_mosaic.version = 11 : i64} {
  func.func @fused_forward_kernel(%arg0: memref<2x8x16xf32, #tpu.memory_space<vmem>>, %arg1: memref<2x128xf32, #tpu.memory_space<vmem>>, %arg2: memref<120x128xf32, #tpu.memory_space<vmem>>, %arg3: memref<352x128xbf16, #tpu.memory_space<vmem>>, %arg4: memref<2x128xf32, #tpu.memory_space<vmem>>) attributes {dimension_semantics = [], scalar_prefetch = 0 : i64, scratch_operands = 0 : i64, tpu.core_type = #tpu.core_type<tc>} {
    %c0 = arith.constant 0 : index
    %c0_0 = arith.constant 0 : index
    %c0_1 = arith.constant 0 : index
    %0 = vector.load %arg0[%c0, %c0_0, %c0_1] : memref<2x8x16xf32, #tpu.memory_space<vmem>>, vector<2x8x16xf32>
    %c0_2 = arith.constant 0 : index
    %c0_3 = arith.constant 0 : index
    %1 = vector.load %arg2[%c0_2, %c0_3] : memref<120x128xf32, #tpu.memory_space<vmem>>, vector<8x24xf32>
    %c8 = arith.constant 8 : index
    %c0_4 = arith.constant 0 : index
    %2 = vector.load %arg2[%c8, %c0_4] : memref<120x128xf32, #tpu.memory_space<vmem>>, vector<1x24xf32>
    %c16 = arith.constant 16 : index
    %c0_5 = arith.constant 0 : index
    %3 = vector.load %arg2[%c16, %c0_5] : memref<120x128xf32, #tpu.memory_space<vmem>>, vector<8x16xf32>
    %c24 = arith.constant 24 : index
    %c0_6 = arith.constant 0 : index
    %4 = vector.load %arg2[%c24, %c0_6] : memref<120x128xf32, #tpu.memory_space<vmem>>, vector<1x16xf32>
    %c32 = arith.constant 32 : index
    %c0_7 = arith.constant 0 : index
    %5 = vector.load %arg2[%c32, %c0_7] : memref<120x128xf32, #tpu.memory_space<vmem>>, vector<1x16xf32>
    %c40 = arith.constant 40 : index
    %c0_8 = arith.constant 0 : index
    %6 = vector.load %arg2[%c40, %c0_8] : memref<120x128xf32, #tpu.memory_space<vmem>>, vector<1x16xf32>
    %c48 = arith.constant 48 : index
    %c0_9 = arith.constant 0 : index
    %7 = vector.load %arg2[%c48, %c0_9] : memref<120x128xf32, #tpu.memory_space<vmem>>, vector<1x128xf32>
    %c56 = arith.constant 56 : index
    %c0_10 = arith.constant 0 : index
    %8 = vector.load %arg2[%c56, %c0_10] : memref<120x128xf32, #tpu.memory_space<vmem>>, vector<1x128xf32>
    %c64 = arith.constant 64 : index
    %c0_11 = arith.constant 0 : index
    %9 = vector.load %arg2[%c64, %c0_11] : memref<120x128xf32, #tpu.memory_space<vmem>>, vector<1x96xf32>
    %c72 = arith.constant 72 : index
    %c0_12 = arith.constant 0 : index
    %10 = vector.load %arg2[%c72, %c0_12] : memref<120x128xf32, #tpu.memory_space<vmem>>, vector<1x32xf32>
    %c80 = arith.constant 80 : index
    %c0_13 = arith.constant 0 : index
    %11 = vector.load %arg2[%c80, %c0_13] : memref<120x128xf32, #tpu.memory_space<vmem>>, vector<1x128xf32>
    %c88 = arith.constant 88 : index
    %c0_14 = arith.constant 0 : index
    %12 = vector.load %arg2[%c88, %c0_14] : memref<120x128xf32, #tpu.memory_space<vmem>>, vector<32x128xf32>
    %c0_15 = arith.constant 0 : index
    %c0_16 = arith.constant 0 : index
    %13 = vector.load %arg3[%c0_15, %c0_16] : memref<352x128xbf16, #tpu.memory_space<vmem>>, vector<32x128xbf16>
    %c32_17 = arith.constant 32 : index
    %c0_18 = arith.constant 0 : index
    %14 = vector.load %arg3[%c32_17, %c0_18] : memref<352x128xbf16, #tpu.memory_space<vmem>>, vector<16x128xbf16>
    %c48_19 = arith.constant 48 : index
    %c0_20 = arith.constant 0 : index
    %15 = vector.load %arg3[%c48_19, %c0_20] : memref<352x128xbf16, #tpu.memory_space<vmem>>, vector<16x128xbf16>
    %c64_21 = arith.constant 64 : index
    %c0_22 = arith.constant 0 : index
    %16 = vector.load %arg3[%c64_21, %c0_22] : memref<352x128xbf16, #tpu.memory_space<vmem>>, vector<128x96xbf16>
    %c192 = arith.constant 192 : index
    %c0_23 = arith.constant 0 : index
    %17 = vector.load %arg3[%c192, %c0_23] : memref<352x128xbf16, #tpu.memory_space<vmem>>, vector<32x32xbf16>
    %c224 = arith.constant 224 : index
    %c0_24 = arith.constant 0 : index
    %18 = vector.load %arg3[%c224, %c0_24] : memref<352x128xbf16, #tpu.memory_space<vmem>>, vector<32x32xbf16>
    %c256 = arith.constant 256 : index
    %c0_25 = arith.constant 0 : index
    %19 = vector.load %arg3[%c256, %c0_25] : memref<352x128xbf16, #tpu.memory_space<vmem>>, vector<96x32xbf16>
    %20 = vector.extract_strided_slice %0 {offsets = [0, 0, 0], sizes = [2, 8, 8], strides = [1, 1, 1]} : vector<2x8x16xf32> to vector<2x8x8xf32>
    %21 = vector.shape_cast %20 : vector<2x8x8xf32> to vector<16x8xf32>
    %cst = arith.constant dense<0.000000e+00> : vector<16x24xf32>
    %22 = tpu.matmul %21, %1, %cst {dimension_numbers = #tpu.dot_dimension_numbers<[1], [0], [0], [1], [0, 0, 1, 1], [], []>} : vector<16x8xf32>, vector<8x24xf32>, vector<16x24xf32> -> vector<16x24xf32>
    %23 = vector.broadcast %2 : vector<1x24xf32> to vector<16x24xf32>
    %24 = arith.addf %22, %23 : vector<16x24xf32>
    %25 = vector.shape_cast %24 : vector<16x24xf32> to vector<2x8x24xf32>
    %26 = vector.extract_strided_slice %25 {offsets = [0, 0, 0], sizes = [2, 8, 4], strides = [1, 1, 1]} : vector<2x8x24xf32> to vector<2x8x4xf32>
    %27 = vector.extract_strided_slice %25 {offsets = [0, 0, 4], sizes = [2, 8, 4], strides = [1, 1, 1]} : vector<2x8x24xf32> to vector<2x8x4xf32>
    %28 = vector.extract_strided_slice %25 {offsets = [0, 0, 8], sizes = [2, 8, 4], strides = [1, 1, 1]} : vector<2x8x24xf32> to vector<2x8x4xf32>
    %29 = vector.extract_strided_slice %25 {offsets = [0, 0, 12], sizes = [2, 8, 4], strides = [1, 1, 1]} : vector<2x8x24xf32> to vector<2x8x4xf32>
    %30 = vector.extract_strided_slice %25 {offsets = [0, 0, 16], sizes = [2, 8, 4], strides = [1, 1, 1]} : vector<2x8x24xf32> to vector<2x8x4xf32>
    %31 = vector.extract_strided_slice %25 {offsets = [0, 0, 20], sizes = [2, 8, 4], strides = [1, 1, 1]} : vector<2x8x24xf32> to vector<2x8x4xf32>
    "tpu.trace_start"() <{level = 10 : i32, message = "bqd,bkd->bqk"}> : () -> ()
    %cst_26 = arith.constant dense<0.000000e+00> : vector<2x8x8xf32>
    %32 = tpu.matmul %26, %28, %cst_26 {dimension_numbers = #tpu.dot_dimension_numbers<[2], [2], [1], [1], [0, 0, 0, 1, 1, 1], [0], [0]>} : vector<2x8x4xf32>, vector<2x8x4xf32>, vector<2x8x8xf32> -> vector<2x8x8xf32>
    %cst_27 = arith.constant dense<0.000000e+00> : vector<2x8x8xf32>
    %33 = tpu.matmul %27, %29, %cst_27 {dimension_numbers = #tpu.dot_dimension_numbers<[2], [2], [1], [1], [0, 0, 0, 1, 1, 1], [0], [0]>} : vector<2x8x4xf32>, vector<2x8x4xf32>, vector<2x8x8xf32> -> vector<2x8x8xf32>
    "tpu.trace_stop"() : () -> ()
    %34 = tpu.concatenate %32, %33 in 0 : vector<2x8x8xf32>, vector<2x8x8xf32> -> vector<4x8x8xf32>
    %cst_28 = arith.constant dense<0xFF800000> : vector<4x8xf32>
    %35 = vector.multi_reduction <maximumf>, %34, %cst_28 [2] : vector<4x8x8xf32> to vector<4x8xf32>
    %36 = vector.shape_cast %35 : vector<4x8xf32> to vector<4x8x1xf32>
    %37 = vector.broadcast %36 : vector<4x8x1xf32> to vector<4x8x8xf32>
    %38 = arith.subf %34, %37 : vector<4x8x8xf32>
    %39 = math.exp %38 : vector<4x8x8xf32>
    %cst_29 = arith.constant dense<0.000000e+00> : vector<4x8xf32>
    %40 = vector.multi_reduction <add>, %39, %cst_29 [2] : vector<4x8x8xf32> to vector<4x8xf32>
    %41 = vector.shape_cast %40 : vector<4x8xf32> to vector<4x8x1xf32>
    %42 = tpu.reciprocal %41 {approx = true} : vector<4x8x1xf32> -> vector<4x8x1xf32>
    %43 = vector.broadcast %42 : vector<4x8x1xf32> to vector<4x8x8xf32>
    %44 = arith.mulf %39, %43 : vector<4x8x8xf32>
    %45 = vector.extract_strided_slice %44 {offsets = [0, 0, 0], sizes = [2, 8, 8], strides = [1, 1, 1]} : vector<4x8x8xf32> to vector<2x8x8xf32>
    "tpu.trace_start"() <{level = 10 : i32, message = "bqk,bkd->bqd"}> : () -> ()
    %cst_30 = arith.constant dense<0.000000e+00> : vector<2x8x4xf32>
    %46 = tpu.matmul %45, %30, %cst_30 {dimension_numbers = #tpu.dot_dimension_numbers<[2], [1], [1], [2], [0, 0, 0, 1, 1, 2], [0], [0]>} : vector<2x8x8xf32>, vector<2x8x4xf32>, vector<2x8x4xf32> -> vector<2x8x4xf32>
    "tpu.trace_stop"() : () -> ()
    %47 = vector.extract_strided_slice %44 {offsets = [2, 0, 0], sizes = [2, 8, 8], strides = [1, 1, 1]} : vector<4x8x8xf32> to vector<2x8x8xf32>
    "tpu.trace_start"() <{level = 10 : i32, message = "bqk,bkd->bqd"}> : () -> ()
    %cst_31 = arith.constant dense<0.000000e+00> : vector<2x8x4xf32>
    %48 = tpu.matmul %47, %31, %cst_31 {dimension_numbers = #tpu.dot_dimension_numbers<[2], [1], [1], [2], [0, 0, 0, 1, 1, 2], [0], [0]>} : vector<2x8x8xf32>, vector<2x8x4xf32>, vector<2x8x4xf32> -> vector<2x8x4xf32>
    "tpu.trace_stop"() : () -> ()
    %49 = vector.shape_cast %46 : vector<2x8x4xf32> to vector<16x4xf32>
    %50 = vector.extract_strided_slice %3 {offsets = [0, 0], sizes = [4, 16], strides = [1, 1]} : vector<8x16xf32> to vector<4x16xf32>
    %cst_32 = arith.constant dense<0.000000e+00> : vector<16x16xf32>
    %51 = tpu.matmul %49, %50, %cst_32 {dimension_numbers = #tpu.dot_dimension_numbers<[1], [0], [0], [1], [0, 0, 1, 1], [], []>} : vector<16x4xf32>, vector<4x16xf32>, vector<16x16xf32> -> vector<16x16xf32>
    %52 = vector.shape_cast %48 : vector<2x8x4xf32> to vector<16x4xf32>
    %53 = vector.extract_strided_slice %3 {offsets = [4, 0], sizes = [4, 16], strides = [1, 1]} : vector<8x16xf32> to vector<4x16xf32>
    %cst_33 = arith.constant dense<0.000000e+00> : vector<16x16xf32>
    %54 = tpu.matmul %52, %53, %cst_33 {dimension_numbers = #tpu.dot_dimension_numbers<[1], [0], [0], [1], [0, 0, 1, 1], [], []>} : vector<16x4xf32>, vector<4x16xf32>, vector<16x16xf32> -> vector<16x16xf32>
    %55 = arith.addf %51, %54 : vector<16x16xf32>
    %56 = vector.broadcast %4 : vector<1x16xf32> to vector<16x16xf32>
    %57 = arith.addf %55, %56 : vector<16x16xf32>
    %58 = vector.shape_cast %57 : vector<16x16xf32> to vector<2x8x16xf32>
    %59 = arith.addf %0, %58 : vector<2x8x16xf32>
    %cst_34 = arith.constant dense<0.000000e+00> : vector<2x8xf32>
    %60 = vector.multi_reduction <add>, %59, %cst_34 [2] : vector<2x8x16xf32> to vector<2x8xf32>
    %61 = vector.shape_cast %60 : vector<2x8xf32> to vector<2x8x1xf32>
    %62 = arith.mulf %59, %59 : vector<2x8x16xf32>
    %cst_35 = arith.constant dense<0.000000e+00> : vector<2x8xf32>
    %63 = vector.multi_reduction <add>, %62, %cst_35 [2] : vector<2x8x16xf32> to vector<2x8xf32>
    %64 = vector.shape_cast %63 : vector<2x8xf32> to vector<2x8x1xf32>
    %cst_36 = arith.constant 6.250000e-02 : f32
    %65 = vector.broadcast %cst_36 : f32 to vector<2x8x1xf32>
    %66 = arith.mulf %61, %65 : vector<2x8x1xf32>
    %cst_37 = arith.constant 6.250000e-02 : f32
    %67 = vector.broadcast %cst_37 : f32 to vector<2x8x1xf32>
    %68 = arith.mulf %64, %67 : vector<2x8x1xf32>
    %69 = arith.mulf %66, %66 : vector<2x8x1xf32>
    %70 = arith.subf %68, %69 : vector<2x8x1xf32>
    %71 = vector.broadcast %66 : vector<2x8x1xf32> to vector<2x8x16xf32>
    %72 = arith.subf %59, %71 : vector<2x8x16xf32>
    %cst_38 = arith.constant 9.99999974E-6 : f32
    %73 = vector.broadcast %cst_38 : f32 to vector<2x8x1xf32>
    %74 = arith.addf %70, %73 : vector<2x8x1xf32>
    %75 = math.rsqrt %74 : vector<2x8x1xf32>
    %76 = vector.broadcast %75 : vector<2x8x1xf32> to vector<2x8x16xf32>
    %77 = arith.mulf %72, %76 : vector<2x8x16xf32>
    %78 = vector.shape_cast %5 : vector<1x16xf32> to vector<1x1x16xf32>
    %79 = vector.broadcast %78 : vector<1x1x16xf32> to vector<2x8x16xf32>
    %80 = arith.mulf %77, %79 : vector<2x8x16xf32>
    %81 = vector.shape_cast %6 : vector<1x16xf32> to vector<1x1x16xf32>
    %82 = vector.broadcast %81 : vector<1x1x16xf32> to vector<2x8x16xf32>
    %83 = arith.addf %80, %82 : vector<2x8x16xf32>
    %84 = vector.shape_cast %83 : vector<2x8x16xf32> to vector<16x16xf32>
    %85 = arith.truncf %84 : vector<16x16xf32> to vector<16x16xbf16>
    %cst_39 = arith.constant dense<0.000000e+00> : vector<16x128xf32>
    %86 = tpu.matmul %85, %14, %cst_39 {dimension_numbers = #tpu.dot_dimension_numbers<[1], [0], [0], [1], [0, 0, 1, 1], [], []>} : vector<16x16xbf16>, vector<16x128xbf16>, vector<16x128xf32> -> vector<16x128xf32>
    %87 = vector.broadcast %7 : vector<1x128xf32> to vector<16x128xf32>
    %88 = arith.addf %86, %87 : vector<16x128xf32>
    %89 = vector.shape_cast %88 : vector<16x128xf32> to vector<2x8x128xf32>
    %cst_40 = arith.constant 0.000000e+00 : f32
    %90 = vector.broadcast %cst_40 : f32 to vector<2x32xf32>
    %91 = vector.extract_strided_slice %89 {offsets = [0, 0, 0], sizes = [2, 1, 128], strides = [1, 1, 1]} : vector<2x8x128xf32> to vector<2x1x128xf32>
    %92 = vector.shape_cast %91 : vector<2x1x128xf32> to vector<2x128xf32>
    %93 = arith.negf %92 : vector<2x128xf32>
    %94 = math.exp %93 : vector<2x128xf32>
    %cst_41 = arith.constant 1.000000e+00 : f32
    %95 = vector.broadcast %cst_41 : f32 to vector<2x128xf32>
    %96 = arith.addf %95, %94 : vector<2x128xf32>
    %97 = arith.divf %95, %96 : vector<2x128xf32>
    %98 = math.tanh %92 : vector<2x128xf32>
    %99 = vector.extract_strided_slice %97 {offsets = [0, 32], sizes = [2, 32], strides = [1, 1]} : vector<2x128xf32> to vector<2x32xf32>
    %100 = arith.mulf %99, %90 : vector<2x32xf32>
    %101 = vector.extract_strided_slice %97 {offsets = [0, 0], sizes = [2, 32], strides = [1, 1]} : vector<2x128xf32> to vector<2x32xf32>
    %102 = vector.extract_strided_slice %98 {offsets = [0, 64], sizes = [2, 32], strides = [1, 1]} : vector<2x128xf32> to vector<2x32xf32>
    %103 = arith.mulf %101, %102 : vector<2x32xf32>
    %104 = arith.addf %100, %103 : vector<2x32xf32>
    %105 = vector.extract_strided_slice %97 {offsets = [0, 96], sizes = [2, 32], strides = [1, 1]} : vector<2x128xf32> to vector<2x32xf32>
    %106 = math.tanh %104 : vector<2x32xf32>
    %107 = arith.mulf %105, %106 : vector<2x32xf32>
    %108 = vector.extract_strided_slice %89 {offsets = [0, 1, 0], sizes = [2, 1, 128], strides = [1, 1, 1]} : vector<2x8x128xf32> to vector<2x1x128xf32>
    %109 = vector.shape_cast %108 : vector<2x1x128xf32> to vector<2x128xf32>
    %110 = arith.truncf %107 : vector<2x32xf32> to vector<2x32xbf16>
    %cst_42 = arith.constant dense<0.000000e+00> : vector<2x128xf32>
    %111 = tpu.matmul %110, %13, %cst_42 {dimension_numbers = #tpu.dot_dimension_numbers<[1], [0], [0], [1], [0, 0, 1, 1], [], []>} : vector<2x32xbf16>, vector<32x128xbf16>, vector<2x128xf32> -> vector<2x128xf32>
    %112 = arith.addf %109, %111 : vector<2x128xf32>
    %113 = arith.negf %112 : vector<2x128xf32>
    %114 = math.exp %113 : vector<2x128xf32>
    %cst_43 = arith.constant 1.000000e+00 : f32
    %115 = vector.broadcast %cst_43 : f32 to vector<2x128xf32>
    %116 = arith.addf %115, %114 : vector<2x128xf32>
    %117 = arith.divf %115, %116 : vector<2x128xf32>
    %118 = math.tanh %112 : vector<2x128xf32>
    %119 = vector.extract_strided_slice %117 {offsets = [0, 32], sizes = [2, 32], strides = [1, 1]} : vector<2x128xf32> to vector<2x32xf32>
    %120 = arith.mulf %119, %104 : vector<2x32xf32>
    %121 = vector.extract_strided_slice %117 {offsets = [0, 0], sizes = [2, 32], strides = [1, 1]} : vector<2x128xf32> to vector<2x32xf32>
    %122 = vector.extract_strided_slice %118 {offsets = [0, 64], sizes = [2, 32], strides = [1, 1]} : vector<2x128xf32> to vector<2x32xf32>
    %123 = arith.mulf %121, %122 : vector<2x32xf32>
    %124 = arith.addf %120, %123 : vector<2x32xf32>
    %125 = vector.extract_strided_slice %117 {offsets = [0, 96], sizes = [2, 32], strides = [1, 1]} : vector<2x128xf32> to vector<2x32xf32>
    %126 = math.tanh %124 : vector<2x32xf32>
    %127 = arith.mulf %125, %126 : vector<2x32xf32>
    %128 = vector.extract_strided_slice %89 {offsets = [0, 2, 0], sizes = [2, 1, 128], strides = [1, 1, 1]} : vector<2x8x128xf32> to vector<2x1x128xf32>
    %129 = vector.shape_cast %128 : vector<2x1x128xf32> to vector<2x128xf32>
    %130 = arith.truncf %127 : vector<2x32xf32> to vector<2x32xbf16>
    %cst_44 = arith.constant dense<0.000000e+00> : vector<2x128xf32>
    %131 = tpu.matmul %130, %13, %cst_44 {dimension_numbers = #tpu.dot_dimension_numbers<[1], [0], [0], [1], [0, 0, 1, 1], [], []>} : vector<2x32xbf16>, vector<32x128xbf16>, vector<2x128xf32> -> vector<2x128xf32>
    %132 = arith.addf %129, %131 : vector<2x128xf32>
    %133 = arith.negf %132 : vector<2x128xf32>
    %134 = math.exp %133 : vector<2x128xf32>
    %cst_45 = arith.constant 1.000000e+00 : f32
    %135 = vector.broadcast %cst_45 : f32 to vector<2x128xf32>
    %136 = arith.addf %135, %134 : vector<2x128xf32>
    %137 = arith.divf %135, %136 : vector<2x128xf32>
    %138 = math.tanh %132 : vector<2x128xf32>
    %139 = vector.extract_strided_slice %137 {offsets = [0, 32], sizes = [2, 32], strides = [1, 1]} : vector<2x128xf32> to vector<2x32xf32>
    %140 = arith.mulf %139, %124 : vector<2x32xf32>
    %141 = vector.extract_strided_slice %137 {offsets = [0, 0], sizes = [2, 32], strides = [1, 1]} : vector<2x128xf32> to vector<2x32xf32>
    %142 = vector.extract_strided_slice %138 {offsets = [0, 64], sizes = [2, 32], strides = [1, 1]} : vector<2x128xf32> to vector<2x32xf32>
    %143 = arith.mulf %141, %142 : vector<2x32xf32>
    %144 = arith.addf %140, %143 : vector<2x32xf32>
    %145 = vector.extract_strided_slice %137 {offsets = [0, 96], sizes = [2, 32], strides = [1, 1]} : vector<2x128xf32> to vector<2x32xf32>
    %146 = math.tanh %144 : vector<2x32xf32>
    %147 = arith.mulf %145, %146 : vector<2x32xf32>
    %148 = vector.extract_strided_slice %89 {offsets = [0, 3, 0], sizes = [2, 1, 128], strides = [1, 1, 1]} : vector<2x8x128xf32> to vector<2x1x128xf32>
    %149 = vector.shape_cast %148 : vector<2x1x128xf32> to vector<2x128xf32>
    %150 = arith.truncf %147 : vector<2x32xf32> to vector<2x32xbf16>
    %cst_46 = arith.constant dense<0.000000e+00> : vector<2x128xf32>
    %151 = tpu.matmul %150, %13, %cst_46 {dimension_numbers = #tpu.dot_dimension_numbers<[1], [0], [0], [1], [0, 0, 1, 1], [], []>} : vector<2x32xbf16>, vector<32x128xbf16>, vector<2x128xf32> -> vector<2x128xf32>
    %152 = arith.addf %149, %151 : vector<2x128xf32>
    %153 = arith.negf %152 : vector<2x128xf32>
    %154 = math.exp %153 : vector<2x128xf32>
    %cst_47 = arith.constant 1.000000e+00 : f32
    %155 = vector.broadcast %cst_47 : f32 to vector<2x128xf32>
    %156 = arith.addf %155, %154 : vector<2x128xf32>
    %157 = arith.divf %155, %156 : vector<2x128xf32>
    %158 = math.tanh %152 : vector<2x128xf32>
    %159 = vector.extract_strided_slice %157 {offsets = [0, 32], sizes = [2, 32], strides = [1, 1]} : vector<2x128xf32> to vector<2x32xf32>
    %160 = arith.mulf %159, %144 : vector<2x32xf32>
    %161 = vector.extract_strided_slice %157 {offsets = [0, 0], sizes = [2, 32], strides = [1, 1]} : vector<2x128xf32> to vector<2x32xf32>
    %162 = vector.extract_strided_slice %158 {offsets = [0, 64], sizes = [2, 32], strides = [1, 1]} : vector<2x128xf32> to vector<2x32xf32>
    %163 = arith.mulf %161, %162 : vector<2x32xf32>
    %164 = arith.addf %160, %163 : vector<2x32xf32>
    %165 = vector.extract_strided_slice %157 {offsets = [0, 96], sizes = [2, 32], strides = [1, 1]} : vector<2x128xf32> to vector<2x32xf32>
    %166 = math.tanh %164 : vector<2x32xf32>
    %167 = arith.mulf %165, %166 : vector<2x32xf32>
    %168 = vector.extract_strided_slice %89 {offsets = [0, 4, 0], sizes = [2, 1, 128], strides = [1, 1, 1]} : vector<2x8x128xf32> to vector<2x1x128xf32>
    %169 = vector.shape_cast %168 : vector<2x1x128xf32> to vector<2x128xf32>
    %170 = arith.truncf %167 : vector<2x32xf32> to vector<2x32xbf16>
    %cst_48 = arith.constant dense<0.000000e+00> : vector<2x128xf32>
    %171 = tpu.matmul %170, %13, %cst_48 {dimension_numbers = #tpu.dot_dimension_numbers<[1], [0], [0], [1], [0, 0, 1, 1], [], []>} : vector<2x32xbf16>, vector<32x128xbf16>, vector<2x128xf32> -> vector<2x128xf32>
    %172 = arith.addf %169, %171 : vector<2x128xf32>
    %173 = arith.negf %172 : vector<2x128xf32>
    %174 = math.exp %173 : vector<2x128xf32>
    %cst_49 = arith.constant 1.000000e+00 : f32
    %175 = vector.broadcast %cst_49 : f32 to vector<2x128xf32>
    %176 = arith.addf %175, %174 : vector<2x128xf32>
    %177 = arith.divf %175, %176 : vector<2x128xf32>
    %178 = math.tanh %172 : vector<2x128xf32>
    %179 = vector.extract_strided_slice %177 {offsets = [0, 32], sizes = [2, 32], strides = [1, 1]} : vector<2x128xf32> to vector<2x32xf32>
    %180 = arith.mulf %179, %164 : vector<2x32xf32>
    %181 = vector.extract_strided_slice %177 {offsets = [0, 0], sizes = [2, 32], strides = [1, 1]} : vector<2x128xf32> to vector<2x32xf32>
    %182 = vector.extract_strided_slice %178 {offsets = [0, 64], sizes = [2, 32], strides = [1, 1]} : vector<2x128xf32> to vector<2x32xf32>
    %183 = arith.mulf %181, %182 : vector<2x32xf32>
    %184 = arith.addf %180, %183 : vector<2x32xf32>
    %185 = vector.extract_strided_slice %177 {offsets = [0, 96], sizes = [2, 32], strides = [1, 1]} : vector<2x128xf32> to vector<2x32xf32>
    %186 = math.tanh %184 : vector<2x32xf32>
    %187 = arith.mulf %185, %186 : vector<2x32xf32>
    %188 = vector.extract_strided_slice %89 {offsets = [0, 5, 0], sizes = [2, 1, 128], strides = [1, 1, 1]} : vector<2x8x128xf32> to vector<2x1x128xf32>
    %189 = vector.shape_cast %188 : vector<2x1x128xf32> to vector<2x128xf32>
    %190 = arith.truncf %187 : vector<2x32xf32> to vector<2x32xbf16>
    %cst_50 = arith.constant dense<0.000000e+00> : vector<2x128xf32>
    %191 = tpu.matmul %190, %13, %cst_50 {dimension_numbers = #tpu.dot_dimension_numbers<[1], [0], [0], [1], [0, 0, 1, 1], [], []>} : vector<2x32xbf16>, vector<32x128xbf16>, vector<2x128xf32> -> vector<2x128xf32>
    %192 = arith.addf %189, %191 : vector<2x128xf32>
    %193 = arith.negf %192 : vector<2x128xf32>
    %194 = math.exp %193 : vector<2x128xf32>
    %cst_51 = arith.constant 1.000000e+00 : f32
    %195 = vector.broadcast %cst_51 : f32 to vector<2x128xf32>
    %196 = arith.addf %195, %194 : vector<2x128xf32>
    %197 = arith.divf %195, %196 : vector<2x128xf32>
    %198 = math.tanh %192 : vector<2x128xf32>
    %199 = vector.extract_strided_slice %197 {offsets = [0, 32], sizes = [2, 32], strides = [1, 1]} : vector<2x128xf32> to vector<2x32xf32>
    %200 = arith.mulf %199, %184 : vector<2x32xf32>
    %201 = vector.extract_strided_slice %197 {offsets = [0, 0], sizes = [2, 32], strides = [1, 1]} : vector<2x128xf32> to vector<2x32xf32>
    %202 = vector.extract_strided_slice %198 {offsets = [0, 64], sizes = [2, 32], strides = [1, 1]} : vector<2x128xf32> to vector<2x32xf32>
    %203 = arith.mulf %201, %202 : vector<2x32xf32>
    %204 = arith.addf %200, %203 : vector<2x32xf32>
    %205 = vector.extract_strided_slice %197 {offsets = [0, 96], sizes = [2, 32], strides = [1, 1]} : vector<2x128xf32> to vector<2x32xf32>
    %206 = math.tanh %204 : vector<2x32xf32>
    %207 = arith.mulf %205, %206 : vector<2x32xf32>
    %208 = vector.extract_strided_slice %89 {offsets = [0, 6, 0], sizes = [2, 1, 128], strides = [1, 1, 1]} : vector<2x8x128xf32> to vector<2x1x128xf32>
    %209 = vector.shape_cast %208 : vector<2x1x128xf32> to vector<2x128xf32>
    %210 = arith.truncf %207 : vector<2x32xf32> to vector<2x32xbf16>
    %cst_52 = arith.constant dense<0.000000e+00> : vector<2x128xf32>
    %211 = tpu.matmul %210, %13, %cst_52 {dimension_numbers = #tpu.dot_dimension_numbers<[1], [0], [0], [1], [0, 0, 1, 1], [], []>} : vector<2x32xbf16>, vector<32x128xbf16>, vector<2x128xf32> -> vector<2x128xf32>
    %212 = arith.addf %209, %211 : vector<2x128xf32>
    %213 = arith.negf %212 : vector<2x128xf32>
    %214 = math.exp %213 : vector<2x128xf32>
    %cst_53 = arith.constant 1.000000e+00 : f32
    %215 = vector.broadcast %cst_53 : f32 to vector<2x128xf32>
    %216 = arith.addf %215, %214 : vector<2x128xf32>
    %217 = arith.divf %215, %216 : vector<2x128xf32>
    %218 = math.tanh %212 : vector<2x128xf32>
    %219 = vector.extract_strided_slice %217 {offsets = [0, 32], sizes = [2, 32], strides = [1, 1]} : vector<2x128xf32> to vector<2x32xf32>
    %220 = arith.mulf %219, %204 : vector<2x32xf32>
    %221 = vector.extract_strided_slice %217 {offsets = [0, 0], sizes = [2, 32], strides = [1, 1]} : vector<2x128xf32> to vector<2x32xf32>
    %222 = vector.extract_strided_slice %218 {offsets = [0, 64], sizes = [2, 32], strides = [1, 1]} : vector<2x128xf32> to vector<2x32xf32>
    %223 = arith.mulf %221, %222 : vector<2x32xf32>
    %224 = arith.addf %220, %223 : vector<2x32xf32>
    %225 = vector.extract_strided_slice %217 {offsets = [0, 96], sizes = [2, 32], strides = [1, 1]} : vector<2x128xf32> to vector<2x32xf32>
    %226 = math.tanh %224 : vector<2x32xf32>
    %227 = arith.mulf %225, %226 : vector<2x32xf32>
    %228 = vector.extract_strided_slice %89 {offsets = [0, 7, 0], sizes = [2, 1, 128], strides = [1, 1, 1]} : vector<2x8x128xf32> to vector<2x1x128xf32>
    %229 = vector.shape_cast %228 : vector<2x1x128xf32> to vector<2x128xf32>
    %230 = arith.truncf %227 : vector<2x32xf32> to vector<2x32xbf16>
    %cst_54 = arith.constant dense<0.000000e+00> : vector<2x128xf32>
    %231 = tpu.matmul %230, %13, %cst_54 {dimension_numbers = #tpu.dot_dimension_numbers<[1], [0], [0], [1], [0, 0, 1, 1], [], []>} : vector<2x32xbf16>, vector<32x128xbf16>, vector<2x128xf32> -> vector<2x128xf32>
    %232 = arith.addf %229, %231 : vector<2x128xf32>
    %233 = arith.negf %232 : vector<2x128xf32>
    %234 = math.exp %233 : vector<2x128xf32>
    %cst_55 = arith.constant 1.000000e+00 : f32
    %235 = vector.broadcast %cst_55 : f32 to vector<2x128xf32>
    %236 = arith.addf %235, %234 : vector<2x128xf32>
    %237 = arith.divf %235, %236 : vector<2x128xf32>
    %238 = math.tanh %232 : vector<2x128xf32>
    %239 = vector.extract_strided_slice %237 {offsets = [0, 32], sizes = [2, 32], strides = [1, 1]} : vector<2x128xf32> to vector<2x32xf32>
    %240 = arith.mulf %239, %224 : vector<2x32xf32>
    %241 = vector.extract_strided_slice %237 {offsets = [0, 0], sizes = [2, 32], strides = [1, 1]} : vector<2x128xf32> to vector<2x32xf32>
    %242 = vector.extract_strided_slice %238 {offsets = [0, 64], sizes = [2, 32], strides = [1, 1]} : vector<2x128xf32> to vector<2x32xf32>
    %243 = arith.mulf %241, %242 : vector<2x32xf32>
    %244 = arith.addf %240, %243 : vector<2x32xf32>
    %245 = vector.extract_strided_slice %237 {offsets = [0, 96], sizes = [2, 32], strides = [1, 1]} : vector<2x128xf32> to vector<2x32xf32>
    %246 = math.tanh %244 : vector<2x32xf32>
    %247 = arith.mulf %245, %246 : vector<2x32xf32>
    %248 = vector.extract_strided_slice %83 {offsets = [0, 7, 0], sizes = [2, 1, 16], strides = [1, 1, 1]} : vector<2x8x16xf32> to vector<2x1x16xf32>
    %249 = vector.shape_cast %248 : vector<2x1x16xf32> to vector<2x16xf32>
    %250 = arith.truncf %249 : vector<2x16xf32> to vector<2x16xbf16>
    %cst_56 = arith.constant dense<0.000000e+00> : vector<2x128xf32>
    %251 = tpu.matmul %250, %15, %cst_56 {dimension_numbers = #tpu.dot_dimension_numbers<[1], [0], [0], [1], [0, 0, 1, 1], [], []>} : vector<2x16xbf16>, vector<16x128xbf16>, vector<2x128xf32> -> vector<2x128xf32>
    %252 = vector.broadcast %8 : vector<1x128xf32> to vector<2x128xf32>
    %253 = arith.addf %251, %252 : vector<2x128xf32>
    %254 = arith.negf %253 : vector<2x128xf32>
    %255 = math.exp %254 : vector<2x128xf32>
    %cst_57 = arith.constant 1.000000e+00 : f32
    %256 = vector.broadcast %cst_57 : f32 to vector<2x128xf32>
    %257 = arith.addf %256, %255 : vector<2x128xf32>
    %258 = arith.divf %256, %257 : vector<2x128xf32>
    %259 = math.tanh %253 : vector<2x128xf32>
    %260 = vector.extract_strided_slice %258 {offsets = [0, 0], sizes = [2, 32], strides = [1, 1]} : vector<2x128xf32> to vector<2x32xf32>
    %261 = vector.extract_strided_slice %259 {offsets = [0, 64], sizes = [2, 32], strides = [1, 1]} : vector<2x128xf32> to vector<2x32xf32>
    %262 = arith.mulf %260, %261 : vector<2x32xf32>
    %263 = vector.extract_strided_slice %258 {offsets = [0, 96], sizes = [2, 32], strides = [1, 1]} : vector<2x128xf32> to vector<2x32xf32>
    %264 = math.tanh %262 : vector<2x32xf32>
    %265 = arith.mulf %263, %264 : vector<2x32xf32>
    %c0_58 = arith.constant 0 : index
    %c0_59 = arith.constant 0 : index
    %266 = vector.load %arg1[%c0_58, %c0_59] : memref<2x128xf32, #tpu.memory_space<vmem>>, vector<2x128xf32>
    %267 = arith.truncf %266 : vector<2x128xf32> to vector<2x128xbf16>
    %cst_60 = arith.constant dense<0.000000e+00> : vector<2x96xf32>
    %268 = tpu.matmul %267, %16, %cst_60 {dimension_numbers = #tpu.dot_dimension_numbers<[1], [0], [0], [1], [0, 0, 1, 1], [], []>} : vector<2x128xbf16>, vector<128x96xbf16>, vector<2x96xf32> -> vector<2x96xf32>
    %269 = vector.broadcast %9 : vector<1x96xf32> to vector<2x96xf32>
    %270 = arith.addf %268, %269 : vector<2x96xf32>
    %cst_61 = arith.constant 0.000000e+00 : f32
    %271 = vector.broadcast %cst_61 : f32 to vector<2x96xf32>
    %272 = arith.maximumf %270, %271 : vector<2x96xf32>
    %273 = arith.truncf %247 : vector<2x32xf32> to vector<2x32xbf16>
    %cst_62 = arith.constant dense<0.000000e+00> : vector<2x32xf32>
    %274 = tpu.matmul %273, %17, %cst_62 {dimension_numbers = #tpu.dot_dimension_numbers<[1], [0], [0], [1], [0, 0, 1, 1], [], []>} : vector<2x32xbf16>, vector<32x32xbf16>, vector<2x32xf32> -> vector<2x32xf32>
    %275 = arith.truncf %265 : vector<2x32xf32> to vector<2x32xbf16>
    %cst_63 = arith.constant dense<0.000000e+00> : vector<2x32xf32>
    %276 = tpu.matmul %275, %18, %cst_63 {dimension_numbers = #tpu.dot_dimension_numbers<[1], [0], [0], [1], [0, 0, 1, 1], [], []>} : vector<2x32xbf16>, vector<32x32xbf16>, vector<2x32xf32> -> vector<2x32xf32>
    %277 = arith.addf %274, %276 : vector<2x32xf32>
    %278 = arith.truncf %272 : vector<2x96xf32> to vector<2x96xbf16>
    %cst_64 = arith.constant dense<0.000000e+00> : vector<2x32xf32>
    %279 = tpu.matmul %278, %19, %cst_64 {dimension_numbers = #tpu.dot_dimension_numbers<[1], [0], [0], [1], [0, 0, 1, 1], [], []>} : vector<2x96xbf16>, vector<96x32xbf16>, vector<2x32xf32> -> vector<2x32xf32>
    %280 = arith.addf %277, %279 : vector<2x32xf32>
    %281 = vector.broadcast %10 : vector<1x32xf32> to vector<2x32xf32>
    %282 = arith.addf %280, %281 : vector<2x32xf32>
    %cst_65 = arith.constant 0.000000e+00 : f32
    %283 = vector.broadcast %cst_65 : f32 to vector<2x32xf32>
    %284 = arith.maximumf %282, %283 : vector<2x32xf32>
    %cst_66 = arith.constant dense<0.000000e+00> : vector<2x128xf32>
    %285 = tpu.matmul %284, %12, %cst_66 {dimension_numbers = #tpu.dot_dimension_numbers<[1], [0], [0], [1], [0, 0, 1, 1], [], []>} : vector<2x32xf32>, vector<32x128xf32>, vector<2x128xf32> -> vector<2x128xf32>
    %286 = vector.broadcast %11 : vector<1x128xf32> to vector<2x128xf32>
    %287 = arith.addf %285, %286 : vector<2x128xf32>
    %c0_67 = arith.constant 0 : index
    %c0_68 = arith.constant 0 : index
    %288 = vector.load %arg4[%c0_67, %c0_68] : memref<2x128xf32, #tpu.memory_space<vmem>>, vector<2x128xf32>
    tpu.vector_store %arg4[%c0_67, %c0_68], %287 {strides = array<i32>} : memref<2x128xf32, #tpu.memory_space<vmem>>, vector<2x128xf32>,
    return
  }
}

</mosaic_0001>

<llo_original>
// kernel: emotion_predict_forward.1
$region0: #{emotion_predict_forward.1}
  #allocation0 [shape = 'u32[]', space=smem, size = 0x4, offset = 0x4, fixed_abs, tag = 'smem constant byte address 0x4 - core index']
  #allocation1 [shape = 'u32[72,128]{1,0:T(1,128)}', space=vmem, size = 0x9000, scoped, tag = 'internal scratch']
  %s0 = inlined_call_operand.vmem [shape: f32[2,8,16], index: 0, kind: input, shape index: {}]
  %s1 = inlined_call_operand.vmem [shape: f32[2,128], index: 1, kind: input, shape index: {}]
  %s2 = inlined_call_operand.hbm [shape: f32[120,128], index: 2, kind: input, shape index: {}]
  %s3 = inlined_call_operand.hbm [shape: bf16[352,128], index: 3, kind: input, shape index: {}]
  %s4 = inlined_call_operand.hbm [shape: f32[2,128], index: 4, kind: output, shape index: {}]
  %s5 = sld [smem:[#allocation0]]
  $region34: #{emotion_predict_forward.1} parent=0
    _
  %s7 = ssub.s32 1, %s5
  %s8 = scalar_select 0, %s7, %s5
  $region1: #{emotion_predict_forward.1} parent=0
    #allocation2 [shape = 'u8[61440]{0}', space=vmem, size = 0xf000, scoped, tag = 'input window, operand 2, single buffered']
    #allocation3 [shape = 's32[1]{0}', space=sflag, size = 0x4, scoped, tag = 'scoped memory for emotion_predict_forward.1']
    #allocation4 [shape = 's32[1]{0}', space=sflag, size = 0x4, scoped, tag = 'scoped memory for emotion_predict_forward.1']
    #allocation5 [shape = 'u8[90112]{0}', space=vmem, size = 0x16000, scoped, tag = 'input window, operand 3, single buffered']
    #allocation6 [shape = 's32[1]{0}', space=sflag, size = 0x4, scoped, tag = 'scoped memory for emotion_predict_forward.1']
    #allocation7 [shape = 'u8[1024]{0}', space=vmem, size = 0x400, scoped, tag = 'output window, operand 0, single buffered']
    %9 = vsyncpa [#allocation3], 0
    %10 = vsyncpa [#allocation6], 0
    %11 = vsyncpa [#allocation4], 0
    // Predicated region
    $region2: #{emotion_predict_forward.1} parent=1 // pred_check
      _
    $region3: #{emotion_predict_forward.1} parent=1 // pred_check_branch
      %13 = sbr.rel (0) target = $region5
    $region4: #{emotion_predict_forward.1} parent=1 // pred_region
      _
    $region5: #{emotion_predict_forward.1} parent=1 // pred_fallthru
      _
    // Predicated region
    $region6: #{emotion_predict_forward.1} parent=1 // pred_check
      _
    $region7: #{emotion_predict_forward.1} parent=1 // pred_check_branch
      %15 = sbr.rel (0) target = $region9
    $region8: #{emotion_predict_forward.1} parent=1 // pred_region
      _
    $region9: #{emotion_predict_forward.1} parent=1 // pred_fallthru
      _
    // Predicated region
    $region10: #{emotion_predict_forward.1} parent=1 // pred_check
      _
    $region11: #{emotion_predict_forward.1} parent=1 // pred_check_branch
      %17 = sbr.rel (0) target = $region13
    $region12: #{emotion_predict_forward.1} parent=1 // pred_region
      %19 = vsyncadd [#allocation3], 0
      %s20 = sshll.u32 %s2, 4
      %s21 = int_to_ptr.hbm [resolvable:$true] %s20
      %s22 = sshll.u32 [#allocation2], 4
      %s23 = int_to_ptr.vmem [resolvable:$true] %s22
      %28 = dma.hbm_to_vmem [thread:$0]  %s21, 1920, %s23, [#allocation3], 128, 128, 8
    $region13: #{emotion_predict_forward.1} parent=1 // pred_fallthru
      _
    // Predicated region
    $region14: #{emotion_predict_forward.1} parent=1 // pred_check
      _
    $region15: #{emotion_predict_forward.1} parent=1 // pred_check_branch
      %30 = sbr.rel (0) target = $region17
    $region16: #{emotion_predict_forward.1} parent=1 // pred_region
      %32 = vsyncadd [#allocation6], 0
      %s33 = sshll.u32 %s3, 4
      %s34 = int_to_ptr.hbm [resolvable:$true] %s33
      %s35 = sshll.u32 [#allocation5], 4
      %s36 = int_to_ptr.vmem [resolvable:$true] %s35
      %41 = dma.hbm_to_vmem [thread:$0]  %s34, 2816, %s36, [#allocation6], 64, 64, 4
    $region17: #{emotion_predict_forward.1} parent=1 // pred_fallthru
      _
    // Predicated region
    $region18: #{emotion_predict_forward.1} parent=1 // pred_check
      _
    $region19: #{emotion_predict_forward.1} parent=1 // pred_check_branch
      %43 = sbr.rel (0) target = $region21
    $region20: #{emotion_predict_forward.1} parent=1 // pred_region
      %45 = dma.done [#allocation3], 1920
    $region21: #{emotion_predict_forward.1} parent=1 // pred_fallthru
      _
    // Predicated region
    $region22: #{emotion_predict_forward.1} parent=1 // pred_check
      _
    $region23: #{emotion_predict_forward.1} parent=1 // pred_check_branch
      %47 = sbr.rel (0) target = $region25
    $region24: #{emotion_predict_forward.1} parent=1 // pred_region
      %49 = dma.done [#allocation6], 2816
    $region25: #{emotion_predict_forward.1} parent=1 // pred_fallthru
      _
    %v51 = vld [vmem:[%s0] sm:$0xff]
    %v52 = vld [vmem:[%s0 + $0x8] sm:$0xff]
    %v53 = vld [vmem:[#allocation2] sm:$0xff]
    %v54 = vld [vmem:[#allocation2 + $0x8] sm:$0x1]
    %v55 = vld [vmem:[#allocation2 + $0x10] sm:$0xff]
    %v56 = vld [vmem:[#allocation2 + $0x18] sm:$0x1]
    %v57 = vld [vmem:[#allocation2 + $0x20] sm:$0x1]
    %v58 = vld [vmem:[#allocation2 + $0x28] sm:$0x1]
    %v59 = vld [vmem:[#allocation2 + $0x30] sm:$0x1]
    %v60 = vld [vmem:[#allocation2 + $0x38] sm:$0x1]
    %v61 = vld [vmem:[#allocation2 + $0x40] sm:$0x1]
    %v62 = vld [vmem:[#allocation2 + $0x48] sm:$0x1]
    %v63 = vld [vmem:[#allocation2 + $0x50] sm:$0x1]
    %v64 = vld [vmem:[#allocation2 + $0x58] sm:$0xff]
    %v65 = vld [vmem:[#allocation2 + $0x60] sm:$0xff]
    %v66 = vld [vmem:[#allocation2 + $0x68] sm:$0xff]
    %v67 = vld [vmem:[#allocation2 + $0x70] sm:$0xff]
    %v68 = vld [vmem:[#allocation5] sm:$0xf]
    %v69 = vld [vmem:[#allocation5 + $0x4] sm:$0xf]
    %v70 = vld [vmem:[#allocation5 + $0x8] sm:$0xf]
    %v71 = vld [vmem:[#allocation5 + $0xc] sm:$0xf]
    %v72 = vld [vmem:[#allocation5 + $0x10] sm:$0xf]
    %v73 = vld [vmem:[#allocation5 + $0x14] sm:$0xf]
    %v74 = vld [vmem:[#allocation5 + $0x18] sm:$0xf]
    %v75 = vld [vmem:[#allocation5 + $0x1c] sm:$0xf]
    %v76 = vld [vmem:[#allocation5 + $0x20] sm:$0xf]
    %v77 = vld [vmem:[#allocation5 + $0x24] sm:$0xf]
    %v78 = vld [vmem:[#allocation5 + $0x28] sm:$0xf]
    %v79 = vld [vmem:[#allocation5 + $0x2c] sm:$0xf]
    %v80 = vld [vmem:[#allocation5 + $0x30] sm:$0xf]
    %v81 = vld [vmem:[#allocation5 + $0x34] sm:$0xf]
    %v82 = vld [vmem:[#allocation5 + $0x38] sm:$0xf]
    %v83 = vld [vmem:[#allocation5 + $0x3c] sm:$0xf]
    %v84 = vld [vmem:[#allocation5 + $0x40] sm:$0xf]
    %v85 = vld [vmem:[#allocation5 + $0x44] sm:$0xf]
    %v86 = vld [vmem:[#allocation5 + $0x48] sm:$0xf]
    %v87 = vld [vmem:[#allocation5 + $0x4c] sm:$0xf]
    %v88 = vld [vmem:[#allocation5 + $0x50] sm:$0xf]
    %v89 = vld [vmem:[#allocation5 + $0x54] sm:$0xf]
    %v90 = vld [vmem:[#allocation5 + $0x58] sm:$0xf]
    %v91 = vld [vmem:[#allocation5 + $0x5c] sm:$0xf]
    %v92 = vld [vmem:[#allocation5 + $0x60] sm:$0xf]
    %v93 = vld [vmem:[#allocation5 + $0x64] sm:$0xf]
    %v94 = vld [vmem:[#allocation5 + $0x68] sm:$0xf]
    %v95 = vld [vmem:[#allocation5 + $0x6c] sm:$0xf]
    %v96 = vld [vmem:[#allocation5 + $0x70] sm:$0xf]
    %v97 = vld [vmem:[#allocation5 + $0x74] sm:$0xf]
    %v98 = vld [vmem:[#allocation5 + $0x78] sm:$0xf]
    %v99 = vld [vmem:[#allocation5 + $0x7c] sm:$0xf]
    %v100 = vld [vmem:[#allocation5 + $0x80] sm:$0xf]
    %v101 = vld [vmem:[#allocation5 + $0x84] sm:$0xf]
    %v102 = vld [vmem:[#allocation5 + $0x88] sm:$0xf]
    %v103 = vld [vmem:[#allocation5 + $0x8c] sm:$0xf]
    %v104 = vld [vmem:[#allocation5 + $0x90] sm:$0xf]
    %v105 = vld [vmem:[#allocation5 + $0x94] sm:$0xf]
    %v106 = vld [vmem:[#allocation5 + $0x98] sm:$0xf]
    %v107 = vld [vmem:[#allocation5 + $0x9c] sm:$0xf]
    %v108 = vld [vmem:[#allocation5 + $0xa0] sm:$0xf]
    %v109 = vld [vmem:[#allocation5 + $0xa4] sm:$0xf]
    %v110 = vld [vmem:[#allocation5 + $0xa8] sm:$0xf]
    %v111 = vld [vmem:[#allocation5 + $0xac] sm:$0xf]
    %v112 = vperm.slane %v54, 0
    %vm113 = vcmask 64512
    %v115 = vsel %vm113, %v51, 0
    %v118 = vsel %vm113, %v52, 0
    %120 = vmatpush.msra.mxu0 0.0
    %121 = vmatpush.msra.mxu0 0.0
    %122 = vmatpush.msra.mxu0 0.0
    %123 = vmatpush.msra.mxu0 0.0
    %124 = vmatpush.msra.mxu0 0.0
    %125 = vmatpush.msra.mxu0 0.0
    %126 = vmatpush.msra.mxu0 0.0
    %127 = vmatpush.msra.mxu0 0.0
    %128 = vmatpush.msra.mxu0 0.0
    %129 = vmatpush.msra.mxu0 0.0
    %130 = vmatpush.msra.mxu0 0.0
    %131 = vmatpush.msra.mxu0 0.0
    %132 = vmatpush.msra.mxu0 0.0
    %133 = vmatpush.msra.mxu0 0.0
    %134 = vmatpush.msra.mxu0 0.0
    %135 = vmatpush.msra.mxu0 %v53
    %136 = vmatmul.f32.gmra.mxu0 %v115
    %v137 = vpop.f32.mrf.mxu0
    %v138 = vadd.f32 %v112, %v137
    %139 = vmatmul.f32.gmra.mxu0 %v118
    %v140 = vpop.f32.mrf.mxu0
    %v141 = vadd.f32 %v112, %v140
    %142 = vdwg.mxu0
    %144 = vrot.lane.b32.xlu0 %v138, 120
    %v145 = vpop.permute.xlu0 %144
    %vm146 = vcmask 31744
    %v147 = vsel %vm146, %v138, 0
    %v149 = vsel %vm146, %v145, 0
    %151 = vmatpush.xpose.msra.mxu0 0.0
    %152 = vmatpush.xpose.msra.mxu0 0.0
    %153 = vmatpush.xpose.msra.mxu0 0.0
    %154 = vmatpush.xpose.msra.mxu0 0.0
    %155 = vmatpush.xpose.msra.mxu0 0.0
    %156 = vmatpush.xpose.msra.mxu0 0.0
    %157 = vmatpush.xpose.msra.mxu0 0.0
    %158 = vmatpush.xpose.msra.mxu0 0.0
    %159 = vmatpush.xpose.msra.mxu0 0.0
    %160 = vmatpush.xpose.msra.mxu0 0.0
    %161 = vmatpush.xpose.msra.mxu0 0.0
    %162 = vmatpush.xpose.msra.mxu0 0.0
    %163 = vmatpush.xpose.msra.mxu0 0.0
    %164 = vmatpush.xpose.msra.mxu0 0.0
    %165 = vmatpush.xpose.msra.mxu0 0.0
    %166 = vmatpush.xpose.msra.mxu0 %v149
    %167 = vmatmul.f32.gmra.mxu0 %v147
    %v168 = vpop.f32.mrf.mxu0
    %v169 = vadd.f32 0.0, %v168
    %170 = vdwg.mxu0
    %172 = vrot.lane.b32.xlu0 %v141, 120
    %v173 = vpop.permute.xlu0 %172
    %v174 = vsel %vm146, %v141, 0
    %v176 = vsel %vm146, %v173, 0
    %178 = vmatpush.xpose.msra.mxu0 0.0
    %179 = vmatpush.xpose.msra.mxu0 0.0
    %180 = vmatpush.xpose.msra.mxu0 0.0
    %181 = vmatpush.xpose.msra.mxu0 0.0
    %182 = vmatpush.xpose.msra.mxu0 0.0
    %183 = vmatpush.xpose.msra.mxu0 0.0
    %184 = vmatpush.xpose.msra.mxu0 0.0
    %185 = vmatpush.xpose.msra.mxu0 0.0
    %186 = vmatpush.xpose.msra.mxu0 0.0
    %187 = vmatpush.xpose.msra.mxu0 0.0
    %188 = vmatpush.xpose.msra.mxu0 0.0
    %189 = vmatpush.xpose.msra.mxu0 0.0
    %190 = vmatpush.xpose.msra.mxu0 0.0
    %191 = vmatpush.xpose.msra.mxu0 0.0
    %192 = vmatpush.xpose.msra.mxu0 0.0
    %193 = vmatpush.xpose.msra.mxu0 %v176
    %194 = vmatmul.f32.gmra.mxu0 %v174
    %v195 = vpop.f32.mrf.mxu0
    %v196 = vadd.f32 0.0, %v195
    %197 = vdwg.mxu0
    %198 = vrot.lane.b32.xlu0 %v138, 124
    %v199 = vpop.permute.xlu0 %198
    %200 = vrot.lane.b32.xlu0 %v138, 116
    %v201 = vpop.permute.xlu0 %200
    %v202 = vsel %vm146, %v199, 0
    %v204 = vsel %vm146, %v201, 0
    %206 = vmatpush.xpose.msra.mxu0 0.0
    %207 = vmatpush.xpose.msra.mxu0 0.0
    %208 = vmatpush.xpose.msra.mxu0 0.0
    %209 = vmatpush.xpose.msra.mxu0 0.0
    %210 = vmatpush.xpose.msra.mxu0 0.0
    %211 = vmatpush.xpose.msra.mxu0 0.0
    %212 = vmatpush.xpose.msra.mxu0 0.0
    %213 = vmatpush.xpose.msra.mxu0 0.0
    %214 = vmatpush.xpose.msra.mxu0 0.0
    %215 = vmatpush.xpose.msra.mxu0 0.0
    %216 = vmatpush.xpose.msra.mxu0 0.0
    %217 = vmatpush.xpose.msra.mxu0 0.0
    %218 = vmatpush.xpose.msra.mxu0 0.0
    %219 = vmatpush.xpose.msra.mxu0 0.0
    %220 = vmatpush.xpose.msra.mxu0 0.0
    %221 = vmatpush.xpose.msra.mxu0 %v204
    %222 = vmatmul.f32.gmra.mxu0 %v202
    %v223 = vpop.f32.mrf.mxu0
    %v224 = vadd.f32 0.0, %v223
    %225 = vdwg.mxu0
    %226 = vrot.lane.b32.xlu0 %v141, 124
    %v227 = vpop.permute.xlu0 %226
    %228 = vrot.lane.b32.xlu0 %v141, 116
    %v229 = vpop.permute.xlu0 %228
    %v230 = vsel %vm146, %v227, 0
    %v232 = vsel %vm146, %v229, 0
    %234 = vmatpush.xpose.msra.mxu0 0.0
    %235 = vmatpush.xpose.msra.mxu0 0.0
    %236 = vmatpush.xpose.msra.mxu0 0.0
    %237 = vmatpush.xpose.msra.mxu0 0.0
    %238 = vmatpush.xpose.msra.mxu0 0.0
    %239 = vmatpush.xpose.msra.mxu0 0.0
    %240 = vmatpush.xpose.msra.mxu0 0.0
    %241 = vmatpush.xpose.msra.mxu0 0.0
    %242 = vmatpush.xpose.msra.mxu0 0.0
    %243 = vmatpush.xpose.msra.mxu0 0.0
    %244 = vmatpush.xpose.msra.mxu0 0.0
    %245 = vmatpush.xpose.msra.mxu0 0.0
    %246 = vmatpush.xpose.msra.mxu0 0.0
    %247 = vmatpush.xpose.msra.mxu0 0.0
    %248 = vmatpush.xpose.msra.mxu0 0.0
    %249 = vmatpush.xpose.msra.mxu0 %v232
    %250 = vmatmul.f32.gmra.mxu0 %v230
    %v251 = vpop.f32.mrf.mxu0
    %v252 = vadd.f32 0.0, %v251
    %253 = vdwg.mxu0
    %v254 = vsel %vm113, %v169, -inf
    %255 = vmax.xlane.f32.xlu0 %v254
    %v256 = vpop.xlane.xlu0 %255
    %v257 = vsel %vm113, %v196, -inf
    %258 = vmax.xlane.f32.xlu0 %v257
    %v259 = vpop.xlane.xlu0 %258
    %v260 = vsel %vm113, %v224, -inf
    %261 = vmax.xlane.f32.xlu0 %v260
    %v262 = vpop.xlane.xlu0 %261
    %v263 = vsel %vm113, %v252, -inf
    %264 = vmax.xlane.f32.xlu0 %v263
    %v265 = vpop.xlane.xlu0 %264
    %v266 = vsub.f32 %v169, %v256
    %v267 = vsub.f32 %v196, %v259
    %v268 = vsub.f32 %v224, %v262
    %v269 = vsub.f32 %v252, %v265
    %v270 = vmul.f32 %v266, 1.442695
    %v271 = vpow.pop %v270
    %v272 = vmul.f32 %v267, 1.442695
    %v273 = vpow.pop %v272
    %v274 = vmul.f32 %v268, 1.442695
    %v275 = vpow.pop %v274
    %v276 = vmul.f32 %v269, 1.442695
    %v277 = vpow.pop %v276
    %v278 = vsel %vm113, %v271, 0.0
    %279 = vadd.xlane.f32.xlu0 %v278
    %v280 = vpop.xlane.xlu0 %279
    %v281 = vsel %vm113, %v273, 0.0
    %282 = vadd.xlane.f32.xlu0 %v281
    %v283 = vpop.xlane.xlu0 %282
    %v284 = vsel %vm113, %v275, 0.0
    %285 = vadd.xlane.f32.xlu0 %v284
    %v286 = vpop.xlane.xlu0 %285
    %v287 = vsel %vm113, %v277, 0.0
    %288 = vadd.xlane.f32.xlu0 %v287
    %v289 = vpop.xlane.xlu0 %288
    %v290 = vrcp.pop %v280
    %v291 = vrcp.pop %v283
    %v292 = vrcp.pop %v286
    %v293 = vrcp.pop %v289
    %v294 = vmul.f32 %v271, %v290
    %v295 = vmul.f32 %v273, %v291
    %v296 = vmul.f32 %v275, %v292
    %v297 = vmul.f32 %v277, %v293
    %298 = vrot.lane.b32.xlu0 %v138, 112
    %v299 = vpop.permute.xlu0 %298
    %v302 = vsel %vm113, %v294, 0
    %304 = vmatpush.msra.mxu0 0.0
    %305 = vmatpush.msra.mxu0 0.0
    %306 = vmatpush.msra.mxu0 0.0
    %307 = vmatpush.msra.mxu0 0.0
    %308 = vmatpush.msra.mxu0 0.0
    %309 = vmatpush.msra.mxu0 0.0
    %310 = vmatpush.msra.mxu0 0.0
    %311 = vmatpush.msra.mxu0 0.0
    %312 = vmatpush.msra.mxu0 0.0
    %313 = vmatpush.msra.mxu0 0.0
    %314 = vmatpush.msra.mxu0 0.0
    %315 = vmatpush.msra.mxu0 0.0
    %316 = vmatpush.msra.mxu0 0.0
    %317 = vmatpush.msra.mxu0 0.0
    %318 = vmatpush.msra.mxu0 0.0
    %319 = vmatpush.msra.mxu0 %v299
    %320 = vmatmul.f32.gmra.mxu0 %v302
    %v321 = vpop.f32.mrf.mxu0
    %v322 = vadd.f32 0.0, %v321
    %323 = vdwg.mxu0
    %324 = vrot.lane.b32.xlu0 %v141, 112
    %v325 = vpop.permute.xlu0 %324
    %v328 = vsel %vm113, %v295, 0
    %330 = vmatpush.msra.mxu0 0.0
    %331 = vmatpush.msra.mxu0 0.0
    %332 = vmatpush.msra.mxu0 0.0
    %333 = vmatpush.msra.mxu0 0.0
    %334 = vmatpush.msra.mxu0 0.0
    %335 = vmatpush.msra.mxu0 0.0
    %336 = vmatpush.msra.mxu0 0.0
    %337 = vmatpush.msra.mxu0 0.0
    %338 = vmatpush.msra.mxu0 0.0
    %339 = vmatpush.msra.mxu0 0.0
    %340 = vmatpush.msra.mxu0 0.0
    %341 = vmatpush.msra.mxu0 0.0
    %342 = vmatpush.msra.mxu0 0.0
    %343 = vmatpush.msra.mxu0 0.0
    %344 = vmatpush.msra.mxu0 0.0
    %345 = vmatpush.msra.mxu0 %v325
    %346 = vmatmul.f32.gmra.mxu0 %v328
    %v347 = vpop.f32.mrf.mxu0
    %v348 = vadd.f32 0.0, %v347
    %349 = vdwg.mxu0
    %350 = vrot.lane.b32.xlu0 %v138, 108
    %v351 = vpop.permute.xlu0 %350
    %v354 = vsel %vm113, %v296, 0
    %356 = vmatpush.msra.mxu0 0.0
    %357 = vmatpush.msra.mxu0 0.0
    %358 = vmatpush.msra.mxu0 0.0
    %359 = vmatpush.msra.mxu0 0.0
    %360 = vmatpush.msra.mxu0 0.0
    %361 = vmatpush.msra.mxu0 0.0
    %362 = vmatpush.msra.mxu0 0.0
    %363 = vmatpush.msra.mxu0 0.0
    %364 = vmatpush.msra.mxu0 0.0
    %365 = vmatpush.msra.mxu0 0.0
    %366 = vmatpush.msra.mxu0 0.0
    %367 = vmatpush.msra.mxu0 0.0
    %368 = vmatpush.msra.mxu0 0.0
    %369 = vmatpush.msra.mxu0 0.0
    %370 = vmatpush.msra.mxu0 0.0
    %371 = vmatpush.msra.mxu0 %v351
    %372 = vmatmul.f32.gmra.mxu0 %v354
    %v373 = vpop.f32.mrf.mxu0
    %v374 = vadd.f32 0.0, %v373
    %375 = vdwg.mxu0
    %376 = vrot.lane.b32.xlu0 %v141, 108
    %v377 = vpop.permute.xlu0 %376
    %v380 = vsel %vm113, %v297, 0
    %382 = vmatpush.msra.mxu0 0.0
    %383 = vmatpush.msra.mxu0 0.0
    %384 = vmatpush.msra.mxu0 0.0
    %385 = vmatpush.msra.mxu0 0.0
    %386 = vmatpush.msra.mxu0 0.0
    %387 = vmatpush.msra.mxu0 0.0
    %388 = vmatpush.msra.mxu0 0.0
    %389 = vmatpush.msra.mxu0 0.0
    %390 = vmatpush.msra.mxu0 0.0
    %391 = vmatpush.msra.mxu0 0.0
    %392 = vmatpush.msra.mxu0 0.0
    %393 = vmatpush.msra.mxu0 0.0
    %394 = vmatpush.msra.mxu0 0.0
    %395 = vmatpush.msra.mxu0 0.0
    %396 = vmatpush.msra.mxu0 0.0
    %397 = vmatpush.msra.mxu0 %v377
    %398 = vmatmul.f32.gmra.mxu0 %v380
    %v399 = vpop.f32.mrf.mxu0
    %v400 = vadd.f32 0.0, %v399
    %401 = vdwg.mxu0
    %v403 = vrot.slane %v55, 4
    %v405 = vsel %vm146, %v374, 0
    %v408 = vsel %vm146, %v400, 0
    %vm410 = vcmask 1043456
    %v411 = vsel %vm410, %v403, 0
    %413 = vmatpush.msra.mxu0 0.0
    %414 = vmatpush.msra.mxu0 0.0
    %415 = vmatpush.msra.mxu0 0.0
    %416 = vmatpush.msra.mxu0 0.0
    %417 = vmatpush.msra.mxu0 0.0
    %418 = vmatpush.msra.mxu0 0.0
    %419 = vmatpush.msra.mxu0 0.0
    %420 = vmatpush.msra.mxu0 0.0
    %421 = vmatpush.msra.mxu0 0.0
    %422 = vmatpush.msra.mxu0 0.0
    %423 = vmatpush.msra.mxu0 0.0
    %424 = vmatpush.msra.mxu0 0.0
    %425 = vmatpush.msra.mxu0 0.0
    %426 = vmatpush.msra.mxu0 0.0
    %427 = vmatpush.msra.mxu0 0.0
    %428 = vmatpush.msra.mxu0 %v411
    %429 = vmatmul.f32.gmra.mxu0 %v405
    %v430 = vpop.f32.mrf.mxu0
    %v431 = vadd.f32 0.0, %v430
    %432 = vmatmul.f32.gmra.mxu0 %v408
    %v433 = vpop.f32.mrf.mxu0
    %v434 = vadd.f32 0.0, %v433
    %435 = vdwg.mxu0
    %v437 = vsel %vm146, %v322, 0
    %v440 = vsel %vm146, %v348, 0
    %v442 = vsel %vm410, %v55, 0
    %444 = vmatpush.msra.mxu0 0.0
    %445 = vmatpush.msra.mxu0 0.0
    %446 = vmatpush.msra.mxu0 0.0
    %447 = vmatpush.msra.mxu0 0.0
    %448 = vmatpush.msra.mxu0 0.0
    %449 = vmatpush.msra.mxu0 0.0
    %450 = vmatpush.msra.mxu0 0.0
    %451 = vmatpush.msra.mxu0 0.0
    %452 = vmatpush.msra.mxu0 0.0
    %453 = vmatpush.msra.mxu0 0.0
    %454 = vmatpush.msra.mxu0 0.0
    %455 = vmatpush.msra.mxu0 0.0
    %456 = vmatpush.msra.mxu0 0.0
    %457 = vmatpush.msra.mxu0 0.0
    %458 = vmatpush.msra.mxu0 0.0
    %459 = vmatpush.msra.mxu0 %v442
    %460 = vmatmul.f32.gmra.mxu0 %v437
    %v461 = vpop.f32.mrf.mxu0
    %v462 = vadd.f32 %v431, %v461
    %463 = vmatmul.f32.gmra.mxu0 %v440
    %v464 = vpop.f32.mrf.mxu0
    %v465 = vadd.f32 %v434, %v464
    %466 = vdwg.mxu0
    %v467 = vperm.slane %v56, 0
    %v468 = vadd.f32 %v462, %v467
    %v469 = vadd.f32 %v465, %v467
    %v470 = vadd.f32 %v51, %v468
    %v471 = vadd.f32 %v52, %v469
    %vm472 = vcmask 130048
    %v473 = vsel %vm472, %v470, 0.0
    %474 = vadd.xlane.f32.xlu0 %v473
    %v475 = vpop.xlane.xlu0 %474
    %v476 = vsel %vm472, %v471, 0.0
    %477 = vadd.xlane.f32.xlu0 %v476
    %v478 = vpop.xlane.xlu0 %477
    %v479 = vmul.f32 %v470, %v470
    %v480 = vmul.f32 %v471, %v471
    %v481 = vsel %vm472, %v479, 0.0
    %482 = vadd.xlane.f32.xlu0 %v481
    %v483 = vpop.xlane.xlu0 %482
    %v484 = vsel %vm472, %v480, 0.0
    %485 = vadd.xlane.f32.xlu0 %v484
    %v486 = vpop.xlane.xlu0 %485
    %v487 = vmul.f32 %v475, 0.0625
    %v488 = vmul.f32 %v478, 0.0625
    %v489 = vmul.f32 %v483, 0.0625
    %v490 = vmul.f32 %v486, 0.0625
    %v491 = vmul.f32 %v487, %v487
    %v492 = vmul.f32 %v488, %v488
    %v493 = vsub.f32 %v489, %v491
    %v494 = vsub.f32 %v490, %v492
    %v495 = vsub.f32 %v470, %v487
    %v496 = vsub.f32 %v471, %v488
    %v497 = vadd.f32 %v493, 1e-05
    %v498 = vadd.f32 %v494, 1e-05
    %v499 = vrsqrt.pop %v497
    %v500 = vmul.f32 %v499, %v497
    %v501 = vmul.f32 %v500, %v499
    %v502 = vmul.f32 0.5, %v501
    %v503 = vsub.f32 1.5, %v502
    %v504 = vmul.f32 %v499, %v503
    %vm505 = vweird.f32 %v497
    %vm506 = vweird.f32 %v499
    %vm507 = vmor %vm505, %vm506
    %v508 = vsel %vm507, %v499, %v504
    %v509 = vrsqrt.pop %v498
    %v510 = vmul.f32 %v509, %v498
    %v511 = vmul.f32 %v510, %v509
    %v512 = vmul.f32 0.5, %v511
    %v513 = vsub.f32 1.5, %v512
    %v514 = vmul.f32 %v509, %v513
    %vm515 = vweird.f32 %v498
    %vm516 = vweird.f32 %v509
    %vm517 = vmor %vm515, %vm516
    %v518 = vsel %vm517, %v509, %v514
    %v519 = vmul.f32 %v495, %v508
    %v520 = vmul.f32 %v496, %v518
    %v521 = vperm.slane %v57, 0
    %v522 = vmul.f32 %v519, %v521
    %v523 = vmul.f32 %v520, %v521
    %v524 = vperm.slane %v58, 0
    %v525 = vadd.f32 %v522, %v524
    %v526 = vadd.f32 %v523, %v524
    %v527 = vpack.c.bf16 %v526, %v525
    %v528 = vperm.slane %v59, 0
    %v531 = vunpack.c.l.b16 %v72
    %v532 = vunpack.c.l.b16 %v73
    %v533 = vpack.c.b16 %v532, %v531
    %v536 = vsel %vm472, %v527, 0
    %538 = vmatpush.bf16.msra.mxu0 0
    %539 = vmatpush.bf16.msra.mxu0 0
    %540 = vmatpush.bf16.msra.mxu0 0
    %541 = vmatpush.bf16.msra.mxu0 0
    %542 = vmatpush.bf16.msra.mxu0 0
    %543 = vmatpush.bf16.msra.mxu0 0
    %544 = vmatpush.bf16.msra.mxu0 0
    %545 = vmatpush.bf16.msra.mxu0 %v533
    %546 = vmatmul.bf16.gmra.mxu0 %v536
    %v547 = vpop.f32.mrf.mxu0
    %v548 = vadd.f32 %v528, %v547
    %v549 = vpop.f32.mrf.mxu0
    %v550 = vadd.f32 %v528, %v549
    %551 = vdwg.mxu0
    %v552 = vxor.u32 %v548, 2147483648
    %v553 = vxor.u32 %v550, 2147483648
    %v554 = vmul.f32 %v552, 1.442695
    %v555 = vpow.pop %v554
    %v556 = vmul.f32 %v553, 1.442695
    %v557 = vpow.pop %v556
    %v558 = vadd.f32 %v555, 1.0
    %v559 = vadd.f32 %v557, 1.0
    %v560 = vrcp.pop %v558
    %v561 = vmul.f32 %v558, %v560
    %v562 = vsub.f32 1.0, %v561
    %v563 = vmul.f32 %v560, %v562
    %v564 = vadd.f32 %v560, %v563
    %vm565 = vweird.f32 %v558
    %vm566 = vweird.f32 %v560
    %vm567 = vmor %vm565, %vm566
    %v568 = vsel %vm567, %v560, %v564
    %v569 = vand.u32 2147483647, %v558
    %vm570 = vcmp.eq.f32.partialorder %v569, 8.507059e+37
    %v571 = vand.u32 %v558, 2147483648
    %v572 = vor.u32 1.1754944e-38, %v571
    %v573 = vsel %vm570, %v572, %v568
    %v574 = vmul.f32 1.0, %v573
    %v575 = vrcp.pop %v559
    %v576 = vmul.f32 %v559, %v575
    %v577 = vsub.f32 1.0, %v576
    %v578 = vmul.f32 %v575, %v577
    %v579 = vadd.f32 %v575, %v578
    %vm580 = vweird.f32 %v559
    %vm581 = vweird.f32 %v575
    %vm582 = vmor %vm580, %vm581
    %v583 = vsel %vm582, %v575, %v579
    %v584 = vand.u32 2147483647, %v559
    %vm585 = vcmp.eq.f32.partialorder %v584, 8.507059e+37
    %v586 = vand.u32 %v559, 2147483648
    %v587 = vor.u32 1.1754944e-38, %v586
    %v588 = vsel %vm585, %v587, %v583
    %v589 = vmul.f32 1.0, %v588
    %v590 = vtanh.pop %v548
    %v591 = vtanh.pop %v550
    %v592 = vmul.f32 %v574, 0.0
    %v593 = vmul.f32 %v589, 0.0
    %596 = vrot.lane.b32.xlu0 %v590, 64
    %v597 = vpop.permute.xlu0 %596
    %598 = vrot.lane.b32.xlu0 %v591, 64
    %v599 = vpop.permute.xlu0 %598
    %v602 = vmul.f32 %v574, %v597
    %v603 = vmul.f32 %v589, %v599
    %606 = vrot.lane.b32.xlu0 %v602, 32
    %v607 = vpop.permute.xlu0 %606
    %608 = vrot.lane.b32.xlu0 %v603, 32
    %v609 = vpop.permute.xlu0 %608
    %v612 = vadd.f32 %v592, %v607
    %v613 = vadd.f32 %v593, %v609
    %v614 = vtanh.pop %v612
    %v615 = vtanh.pop %v613
    %618 = vrot.lane.b32.xlu0 %v614, 64
    %v619 = vpop.permute.xlu0 %618
    %620 = vrot.lane.b32.xlu0 %v615, 64
    %v621 = vpop.permute.xlu0 %620
    %v624 = vmul.f32 %v574, %v619
    %v625 = vmul.f32 %v589, %v621
    %v626 = vpack.c.bf16 %v624, %v624
    %v627 = vpack.c.bf16 %v625, %v625
    %v630 = vunpack.c.l.b16 %v626
    %v631 = vunpack.c.l.b16 %v627
    %v632 = vrot.slane %v631, 7
    %vm633 = vcmask 1041409
    %v634 = vsel %vm633, %v632, %v630
    %v635 = vpack.c.b16 %v634, %v634
    %636 = vrot.lane.b32.xlu0 %v635, 32
    %v637 = vpop.permute.xlu0 %636
    %v642 = vunpack.c.l.b16 %v68
    %v643 = vunpack.c.l.b16 %v69
    %v644 = vunpack.c.l.b16 %v70
    %v645 = vunpack.c.l.b16 %v71
    %v646 = vpack.c.b16 %v643, %v642
    %v647 = vpack.c.b16 %v645, %v644
    %vm650 = vcmask 261120
    %v652 = vsel %vm650, %v637, 0
    %654 = vmatpush.bf16.msra.mxu0 0
    %655 = vmatpush.bf16.msra.mxu0 0
    %656 = vmatpush.bf16.msra.mxu0 0
    %657 = vmatpush.bf16.msra.mxu0 0
    %658 = vmatpush.bf16.msra.mxu0 0
    %659 = vmatpush.bf16.msra.mxu0 0
    %660 = vmatpush.bf16.msra.mxu0 %v647
    %661 = vmatpush.bf16.msra.mxu0 %v646
    %662 = vmatmul.bf16.gmra.mxu0 %v652
    %v663 = vpop.f32.mrf.mxu0
    %v664 = vadd.f32 0.0, %v663
    %v665 = vpop.f32.mrf.mxu0
    %666 = vdwg.mxu0
    %v668 = vrot.slane %v664, 7
    %v671 = vadd.f32 %v548, %v668
    %v672 = vadd.f32 %v550, %v664
    %v673 = vxor.u32 %v671, 2147483648
    %v674 = vxor.u32 %v672, 2147483648
    %v675 = vmul.f32 %v673, 1.442695
    %v676 = vpow.pop %v675
    %v677 = vmul.f32 %v674, 1.442695
    %v678 = vpow.pop %v677
    %v679 = vadd.f32 %v676, 1.0
    %v680 = vadd.f32 %v678, 1.0
    %v681 = vrcp.pop %v679
    %v682 = vmul.f32 %v679, %v681
    %v683 = vsub.f32 1.0, %v682
    %v684 = vmul.f32 %v681, %v683
    %v685 = vadd.f32 %v681, %v684
    %vm686 = vweird.f32 %v679
    %vm687 = vweird.f32 %v681
    %vm688 = vmor %vm686, %vm687
    %v689 = vsel %vm688, %v681, %v685
    %v690 = vand.u32 2147483647, %v679
    %vm691 = vcmp.eq.f32.partialorder %v690, 8.507059e+37
    %v692 = vand.u32 %v679, 2147483648
    %v693 = vor.u32 1.1754944e-38, %v692
    %v694 = vsel %vm691, %v693, %v689
    %v695 = vmul.f32 1.0, %v694
    %v696 = vrcp.pop %v680
    %v697 = vmul.f32 %v680, %v696
    %v698 = vsub.f32 1.0, %v697
    %v699 = vmul.f32 %v696, %v698
    %v700 = vadd.f32 %v696, %v699
    %vm701 = vweird.f32 %v680
    %vm702 = vweird.f32 %v696
    %vm703 = vmor %vm701, %vm702
    %v704 = vsel %vm703, %v696, %v700
    %v705 = vand.u32 2147483647, %v680
    %vm706 = vcmp.eq.f32.partialorder %v705, 8.507059e+37
    %v707 = vand.u32 %v680, 2147483648
    %v708 = vor.u32 1.1754944e-38, %v707
    %v709 = vsel %vm706, %v708, %v704
    %v710 = vmul.f32 1.0, %v709
    %v711 = vtanh.pop %v671
    %v712 = vtanh.pop %v672
    %v715 = vrot.slane %v612, 7
    %v716 = vrot.slane %v613, 7
    %v719 = vmul.f32 %v695, %v715
    %v720 = vmul.f32 %v710, %v716
    %723 = vrot.lane.b32.xlu0 %v711, 64
    %v724 = vpop.permute.xlu0 %723
    %725 = vrot.lane.b32.xlu0 %v712, 64
    %v726 = vpop.permute.xlu0 %725
    %v729 = vmul.f32 %v695, %v724
    %v730 = vmul.f32 %v710, %v726
    %733 = vrot.lane.b32.xlu0 %v729, 32
    %v734 = vpop.permute.xlu0 %733
    %735 = vrot.lane.b32.xlu0 %v730, 32
    %v736 = vpop.permute.xlu0 %735
    %v739 = vadd.f32 %v719, %v734
    %v740 = vadd.f32 %v720, %v736
    %v741 = vtanh.pop %v739
    %v742 = vtanh.pop %v740
    %745 = vrot.lane.b32.xlu0 %v741, 64
    %v746 = vpop.permute.xlu0 %745
    %747 = vrot.lane.b32.xlu0 %v742, 64
    %v748 = vpop.permute.xlu0 %747
    %v751 = vmul.f32 %v695, %v746
    %v752 = vmul.f32 %v710, %v748
    %v753 = vpack.c.bf16 %v751, %v751
    %v754 = vpack.c.bf16 %v752, %v752
    %v757 = vunpack.c.l.b16 %v753
    %v758 = vunpack.c.l.b16 %v754
    %v759 = vrot.slane %v757, 1
    %v760 = vsel %vm633, %v758, %v759
    %v761 = vpack.c.b16 %v760, %v760
    %762 = vrot.lane.b32.xlu0 %v761, 32
    %v763 = vpop.permute.xlu0 %762
    %v765 = vsel %vm650, %v763, 0
    %767 = vmatpush.bf16.msra.mxu0 0
    %768 = vmatpush.bf16.msra.mxu0 0
    %769 = vmatpush.bf16.msra.mxu0 0
    %770 = vmatpush.bf16.msra.mxu0 0
    %771 = vmatpush.bf16.msra.mxu0 0
    %772 = vmatpush.bf16.msra.mxu0 0
    %773 = vmatpush.bf16.msra.mxu0 %v647
    %774 = vmatpush.bf16.msra.mxu0 %v646
    %775 = vmatmul.bf16.gmra.mxu0 %v765
    %v776 = vpop.f32.mrf.mxu0
    %v777 = vadd.f32 0.0, %v776
    %v778 = vpop.f32.mrf.mxu0
    %779 = vdwg.mxu0
    %v781 = vrot.slane %v777, 6
    %v782 = vrot.slane %v777, 7
    %v785 = vadd.f32 %v548, %v781
    %v786 = vadd.f32 %v550, %v782
    %v787 = vxor.u32 %v785, 2147483648
    %v788 = vxor.u32 %v786, 2147483648
    %v789 = vmul.f32 %v787, 1.442695
    %v790 = vpow.pop %v789
    %v791 = vmul.f32 %v788, 1.442695
    %v792 = vpow.pop %v791
    %v793 = vadd.f32 %v790, 1.0
    %v794 = vadd.f32 %v792, 1.0
    %v795 = vrcp.pop %v793
    %v796 = vmul.f32 %v793, %v795
    %v797 = vsub.f32 1.0, %v796
    %v798 = vmul.f32 %v795, %v797
    %v799 = vadd.f32 %v795, %v798
    %vm800 = vweird.f32 %v793
    %vm801 = vweird.f32 %v795
    %vm802 = vmor %vm800, %vm801
    %v803 = vsel %vm802, %v795, %v799
    %v804 = vand.u32 2147483647, %v793
    %vm805 = vcmp.eq.f32.partialorder %v804, 8.507059e+37
    %v806 = vand.u32 %v793, 2147483648
    %v807 = vor.u32 1.1754944e-38, %v806
    %v808 = vsel %vm805, %v807, %v803
    %v809 = vmul.f32 1.0, %v808
    %v810 = vrcp.pop %v794
    %v811 = vmul.f32 %v794, %v810
    %v812 = vsub.f32 1.0, %v811
    %v813 = vmul.f32 %v810, %v812
    %v814 = vadd.f32 %v810, %v813
    %vm815 = vweird.f32 %v794
    %vm816 = vweird.f32 %v810
    %vm817 = vmor %vm815, %vm816
    %v818 = vsel %vm817, %v810, %v814
    %v819 = vand.u32 2147483647, %v794
    %vm820 = vcmp.eq.f32.partialorder %v819, 8.507059e+37
    %v821 = vand.u32 %v794, 2147483648
    %v822 = vor.u32 1.1754944e-38, %v821
    %v823 = vsel %vm820, %v822, %v818
    %v824 = vmul.f32 1.0, %v823
    %v825 = vtanh.pop %v785
    %v826 = vtanh.pop %v786
    %v829 = vrot.slane %v739, 7
    %v830 = vrot.slane %v740, 7
    %v833 = vmul.f32 %v809, %v829
    %v834 = vmul.f32 %v824, %v830
    %837 = vrot.lane.b32.xlu0 %v825, 64
    %v838 = vpop.permute.xlu0 %837
    %839 = vrot.lane.b32.xlu0 %v826, 64
    %v840 = vpop.permute.xlu0 %839
    %v843 = vmul.f32 %v809, %v838
    %v844 = vmul.f32 %v824, %v840
    %847 = vrot.lane.b32.xlu0 %v843, 32
    %v848 = vpop.permute.xlu0 %847
    %849 = vrot.lane.b32.xlu0 %v844, 32
    %v850 = vpop.permute.xlu0 %849
    %v853 = vadd.f32 %v833, %v848
    %v854 = vadd.f32 %v834, %v850
    %v855 = vtanh.pop %v853
    %v856 = vtanh.pop %v854
    %859 = vrot.lane.b32.xlu0 %v855, 64
    %v860 = vpop.permute.xlu0 %859
    %861 = vrot.lane.b32.xlu0 %v856, 64
    %v862 = vpop.permute.xlu0 %861
    %v865 = vmul.f32 %v809, %v860
    %v866 = vmul.f32 %v824, %v862
    %v867 = vpack.c.bf16 %v865, %v865
    %v868 = vpack.c.bf16 %v866, %v866
    %v871 = vunpack.c.l.b16 %v867
    %v872 = vunpack.c.l.b16 %v868
    %v873 = vrot.slane %v871, 2
    %v874 = vrot.slane %v872, 1
    %v875 = vsel %vm633, %v874, %v873
    %v876 = vpack.c.b16 %v875, %v875
    %877 = vrot.lane.b32.xlu0 %v876, 32
    %v878 = vpop.permute.xlu0 %877
    %v880 = vsel %vm650, %v878, 0
    %882 = vmatpush.bf16.msra.mxu0 0
    %883 = vmatpush.bf16.msra.mxu0 0
    %884 = vmatpush.bf16.msra.mxu0 0
    %885 = vmatpush.bf16.msra.mxu0 0
    %886 = vmatpush.bf16.msra.mxu0 0
    %887 = vmatpush.bf16.msra.mxu0 0
    %888 = vmatpush.bf16.msra.mxu0 %v647
    %889 = vmatpush.bf16.msra.mxu0 %v646
    %890 = vmatmul.bf16.gmra.mxu0 %v880
    %v891 = vpop.f32.mrf.mxu0
    %v892 = vadd.f32 0.0, %v891
    %v893 = vpop.f32.mrf.mxu0
    %894 = vdwg.mxu0
    %v896 = vrot.slane %v892, 5
    %v897 = vrot.slane %v892, 6
    %v900 = vadd.f32 %v548, %v896
    %v901 = vadd.f32 %v550, %v897
    %v902 = vxor.u32 %v900, 2147483648
    %v903 = vxor.u32 %v901, 2147483648
    %v904 = vmul.f32 %v902, 1.442695
    %v905 = vpow.pop %v904
    %v906 = vmul.f32 %v903, 1.442695
    %v907 = vpow.pop %v906
    %v908 = vadd.f32 %v905, 1.0
    %v909 = vadd.f32 %v907, 1.0
    %v910 = vrcp.pop %v908
    %v911 = vmul.f32 %v908, %v910
    %v912 = vsub.f32 1.0, %v911
    %v913 = vmul.f32 %v910, %v912
    %v914 = vadd.f32 %v910, %v913
    %vm915 = vweird.f32 %v908
    %vm916 = vweird.f32 %v910
    %vm917 = vmor %vm915, %vm916
    %v918 = vsel %vm917, %v910, %v914
    %v919 = vand.u32 2147483647, %v908
    %vm920 = vcmp.eq.f32.partialorder %v919, 8.507059e+37
    %v921 = vand.u32 %v908, 2147483648
    %v922 = vor.u32 1.1754944e-38, %v921
    %v923 = vsel %vm920, %v922, %v918
    %v924 = vmul.f32 1.0, %v923
    %v925 = vrcp.pop %v909
    %v926 = vmul.f32 %v909, %v925
    %v927 = vsub.f32 1.0, %v926
    %v928 = vmul.f32 %v925, %v927
    %v929 = vadd.f32 %v925, %v928
    %vm930 = vweird.f32 %v909
    %vm931 = vweird.f32 %v925
    %vm932 = vmor %vm930, %vm931
    %v933 = vsel %vm932, %v925, %v929
    %v934 = vand.u32 2147483647, %v909
    %vm935 = vcmp.eq.f32.partialorder %v934, 8.507059e+37
    %v936 = vand.u32 %v909, 2147483648
    %v937 = vor.u32 1.1754944e-38, %v936
    %v938 = vsel %vm935, %v937, %v933
    %v939 = vmul.f32 1.0, %v938
    %v940 = vtanh.pop %v900
    %v941 = vtanh.pop %v901
    %v944 = vrot.slane %v853, 7
    %v945 = vrot.slane %v854, 7
    %v948 = vmul.f32 %v924, %v944
    %v949 = vmul.f32 %v939, %v945
    %952 = vrot.lane.b32.xlu0 %v940, 64
    %v953 = vpop.permute.xlu0 %952
    %954 = vrot.lane.b32.xlu0 %v941, 64
    %v955 = vpop.permute.xlu0 %954
    %v958 = vmul.f32 %v924, %v953
    %v959 = vmul.f32 %v939, %v955
    %962 = vrot.lane.b32.xlu0 %v958, 32
    %v963 = vpop.permute.xlu0 %962
    %964 = vrot.lane.b32.xlu0 %v959, 32
    %v965 = vpop.permute.xlu0 %964
    %v968 = vadd.f32 %v948, %v963
    %v969 = vadd.f32 %v949, %v965
    %v970 = vtanh.pop %v968
    %v971 = vtanh.pop %v969
    %974 = vrot.lane.b32.xlu0 %v970, 64
    %v975 = vpop.permute.xlu0 %974
    %976 = vrot.lane.b32.xlu0 %v971, 64
    %v977 = vpop.permute.xlu0 %976
    %v980 = vmul.f32 %v924, %v975
    %v981 = vmul.f32 %v939, %v977
    %v982 = vpack.c.bf16 %v980, %v980
    %v983 = vpack.c.bf16 %v981, %v981
    %v986 = vunpack.c.l.b16 %v982
    %v987 = vunpack.c.l.b16 %v983
    %v988 = vrot.slane %v986, 3
    %v989 = vrot.slane %v987, 2
    %v990 = vsel %vm633, %v989, %v988
    %v991 = vpack.c.b16 %v990, %v990
    %992 = vrot.lane.b32.xlu0 %v991, 32
    %v993 = vpop.permute.xlu0 %992
    %v995 = vsel %vm650, %v993, 0
    %997 = vmatpush.bf16.msra.mxu0 0
    %998 = vmatpush.bf16.msra.mxu0 0
    %999 = vmatpush.bf16.msra.mxu0 0
    %1000 = vmatpush.bf16.msra.mxu0 0
    %1001 = vmatpush.bf16.msra.mxu0 0
    %1002 = vmatpush.bf16.msra.mxu0 0
    %1003 = vmatpush.bf16.msra.mxu0 %v647
    %1004 = vmatpush.bf16.msra.mxu0 %v646
    %1005 = vmatmul.bf16.gmra.mxu0 %v995
    %v1006 = vpop.f32.mrf.mxu0
    %v1007 = vadd.f32 0.0, %v1006
    %v1008 = vpop.f32.mrf.mxu0
    %1009 = vdwg.mxu0
    %v1011 = vrot.slane %v1007, 4
    %v1012 = vrot.slane %v1007, 5
    %v1015 = vadd.f32 %v548, %v1011
    %v1016 = vadd.f32 %v550, %v1012
    %v1017 = vxor.u32 %v1015, 2147483648
    %v1018 = vxor.u32 %v1016, 2147483648
    %v1019 = vmul.f32 %v1017, 1.442695
    %v1020 = vpow.pop %v1019
    %v1021 = vmul.f32 %v1018, 1.442695
    %v1022 = vpow.pop %v1021
    %v1023 = vadd.f32 %v1020, 1.0
    %v1024 = vadd.f32 %v1022, 1.0
    %v1025 = vrcp.pop %v1023
    %v1026 = vmul.f32 %v1023, %v1025
    %v1027 = vsub.f32 1.0, %v1026
    %v1028 = vmul.f32 %v1025, %v1027
    %v1029 = vadd.f32 %v1025, %v1028
    %vm1030 = vweird.f32 %v1023
    %vm1031 = vweird.f32 %v1025
    %vm1032 = vmor %vm1030, %vm1031
    %v1033 = vsel %vm1032, %v1025, %v1029
    %v1034 = vand.u32 2147483647, %v1023
    %vm1035 = vcmp.eq.f32.partialorder %v1034, 8.507059e+37
    %v1036 = vand.u32 %v1023, 2147483648
    %v1037 = vor.u32 1.1754944e-38, %v1036
    %v1038 = vsel %vm1035, %v1037, %v1033
    %v1039 = vmul.f32 1.0, %v1038
    %v1040 = vrcp.pop %v1024
    %v1041 = vmul.f32 %v1024, %v1040
    %v1042 = vsub.f32 1.0, %v1041
    %v1043 = vmul.f32 %v1040, %v1042
    %v1044 = vadd.f32 %v1040, %v1043
    %vm1045 = vweird.f32 %v1024
    %vm1046 = vweird.f32 %v1040
    %vm1047 = vmor %vm1045, %vm1046
    %v1048 = vsel %vm1047, %v1040, %v1044
    %v1049 = vand.u32 2147483647, %v1024
    %vm1050 = vcmp.eq.f32.partialorder %v1049, 8.507059e+37
    %v1051 = vand.u32 %v1024, 2147483648
    %v1052 = vor.u32 1.1754944e-38, %v1051
    %v1053 = vsel %vm1050, %v1052, %v1048
    %v1054 = vmul.f32 1.0, %v1053
    %v1055 = vtanh.pop %v1015
    %v1056 = vtanh.pop %v1016
    %v1059 = vrot.slane %v968, 7
    %v1060 = vrot.slane %v969, 7
    %v1063 = vmul.f32 %v1039, %v1059
    %v1064 = vmul.f32 %v1054, %v1060
    %1067 = vrot.lane.b32.xlu0 %v1055, 64
    %v1068 = vpop.permute.xlu0 %1067
    %1069 = vrot.lane.b32.xlu0 %v1056, 64
    %v1070 = vpop.permute.xlu0 %1069
    %v1073 = vmul.f32 %v1039, %v1068
    %v1074 = vmul.f32 %v1054, %v1070
    %1077 = vrot.lane.b32.xlu0 %v1073, 32
    %v1078 = vpop.permute.xlu0 %1077
    %1079 = vrot.lane.b32.xlu0 %v1074, 32
    %v1080 = vpop.permute.xlu0 %1079
    %v1083 = vadd.f32 %v1063, %v1078
    %v1084 = vadd.f32 %v1064, %v1080
    %v1085 = vtanh.pop %v1083
    %v1086 = vtanh.pop %v1084
    %1089 = vrot.lane.b32.xlu0 %v1085, 64
    %v1090 = vpop.permute.xlu0 %1089
    %1091 = vrot.lane.b32.xlu0 %v1086, 64
    %v1092 = vpop.permute.xlu0 %1091
    %v1095 = vmul.f32 %v1039, %v1090
    %v1096 = vmul.f32 %v1054, %v1092
    %v1097 = vpack.c.bf16 %v1095, %v1095
    %v1098 = vpack.c.bf16 %v1096, %v1096
    %v1101 = vunpack.c.l.b16 %v1097
    %v1102 = vunpack.c.l.b16 %v1098
    %v1103 = vrot.slane %v1101, 4
    %v1104 = vrot.slane %v1102, 3
    %v1105 = vsel %vm633, %v1104, %v1103
    %v1106 = vpack.c.b16 %v1105, %v1105
    %1107 = vrot.lane.b32.xlu0 %v1106, 32
    %v1108 = vpop.permute.xlu0 %1107
    %v1110 = vsel %vm650, %v1108, 0
    %1112 = vmatpush.bf16.msra.mxu0 0
    %1113 = vmatpush.bf16.msra.mxu0 0
    %1114 = vmatpush.bf16.msra.mxu0 0
    %1115 = vmatpush.bf16.msra.mxu0 0
    %1116 = vmatpush.bf16.msra.mxu0 0
    %1117 = vmatpush.bf16.msra.mxu0 0
    %1118 = vmatpush.bf16.msra.mxu0 %v647
    %1119 = vmatpush.bf16.msra.mxu0 %v646
    %1120 = vmatmul.bf16.gmra.mxu0 %v1110
    %v1121 = vpop.f32.mrf.mxu0
    %v1122 = vadd.f32 0.0, %v1121
    %v1123 = vpop.f32.mrf.mxu0
    %1124 = vdwg.mxu0
    %v1126 = vrot.slane %v1122, 3
    %v1127 = vrot.slane %v1122, 4
    %v1130 = vadd.f32 %v548, %v1126
    %v1131 = vadd.f32 %v550, %v1127
    %v1132 = vxor.u32 %v1130, 2147483648
    %v1133 = vxor.u32 %v1131, 2147483648
    %v1134 = vmul.f32 %v1132, 1.442695
    %v1135 = vpow.pop %v1134
    %v1136 = vmul.f32 %v1133, 1.442695
    %v1137 = vpow.pop %v1136
    %v1138 = vadd.f32 %v1135, 1.0
    %v1139 = vadd.f32 %v1137, 1.0
    %v1140 = vrcp.pop %v1138
    %v1141 = vmul.f32 %v1138, %v1140
    %v1142 = vsub.f32 1.0, %v1141
    %v1143 = vmul.f32 %v1140, %v1142
    %v1144 = vadd.f32 %v1140, %v1143
    %vm1145 = vweird.f32 %v1138
    %vm1146 = vweird.f32 %v1140
    %vm1147 = vmor %vm1145, %vm1146
    %v1148 = vsel %vm1147, %v1140, %v1144
    %v1149 = vand.u32 2147483647, %v1138
    %vm1150 = vcmp.eq.f32.partialorder %v1149, 8.507059e+37
    %v1151 = vand.u32 %v1138, 2147483648
    %v1152 = vor.u32 1.1754944e-38, %v1151
    %v1153 = vsel %vm1150, %v1152, %v1148
    %v1154 = vmul.f32 1.0, %v1153
    %v1155 = vrcp.pop %v1139
    %v1156 = vmul.f32 %v1139, %v1155
    %v1157 = vsub.f32 1.0, %v1156
    %v1158 = vmul.f32 %v1155, %v1157
    %v1159 = vadd.f32 %v1155, %v1158
    %vm1160 = vweird.f32 %v1139
    %vm1161 = vweird.f32 %v1155
    %vm1162 = vmor %vm1160, %vm1161
    %v1163 = vsel %vm1162, %v1155, %v1159
    %v1164 = vand.u32 2147483647, %v1139
    %vm1165 = vcmp.eq.f32.partialorder %v1164, 8.507059e+37
    %v1166 = vand.u32 %v1139, 2147483648
    %v1167 = vor.u32 1.1754944e-38, %v1166
    %v1168 = vsel %vm1165, %v1167, %v1163
    %v1169 = vmul.f32 1.0, %v1168
    %v1170 = vtanh.pop %v1130
    %v1171 = vtanh.pop %v1131
    %v1174 = vrot.slane %v1083, 7
    %v1175 = vrot.slane %v1084, 7
    %v1178 = vmul.f32 %v1154, %v1174
    %v1179 = vmul.f32 %v1169, %v1175
    %1182 = vrot.lane.b32.xlu0 %v1170, 64
    %v1183 = vpop.permute.xlu0 %1182
    %1184 = vrot.lane.b32.xlu0 %v1171, 64
    %v1185 = vpop.permute.xlu0 %1184
    %v1188 = vmul.f32 %v1154, %v1183
    %v1189 = vmul.f32 %v1169, %v1185
    %1192 = vrot.lane.b32.xlu0 %v1188, 32
    %v1193 = vpop.permute.xlu0 %1192
    %1194 = vrot.lane.b32.xlu0 %v1189, 32
    %v1195 = vpop.permute.xlu0 %1194
    %v1198 = vadd.f32 %v1178, %v1193
    %v1199 = vadd.f32 %v1179, %v1195
    %v1200 = vtanh.pop %v1198
    %v1201 = vtanh.pop %v1199
    %1204 = vrot.lane.b32.xlu0 %v1200, 64
    %v1205 = vpop.permute.xlu0 %1204
    %1206 = vrot.lane.b32.xlu0 %v1201, 64
    %v1207 = vpop.permute.xlu0 %1206
    %v1210 = vmul.f32 %v1154, %v1205
    %v1211 = vmul.f32 %v1169, %v1207
    %v1212 = vpack.c.bf16 %v1210, %v1210
    %v1213 = vpack.c.bf16 %v1211, %v1211
    %v1216 = vunpack.c.l.b16 %v1212
    %v1217 = vunpack.c.l.b16 %v1213
    %v1218 = vrot.slane %v1216, 5
    %v1219 = vrot.slane %v1217, 4
    %v1220 = vsel %vm633, %v1219, %v1218
    %v1221 = vpack.c.b16 %v1220, %v1220
    %1222 = vrot.lane.b32.xlu0 %v1221, 32
    %v1223 = vpop.permute.xlu0 %1222
    %v1225 = vsel %vm650, %v1223, 0
    %1227 = vmatpush.bf16.msra.mxu0 0
    %1228 = vmatpush.bf16.msra.mxu0 0
    %1229 = vmatpush.bf16.msra.mxu0 0
    %1230 = vmatpush.bf16.msra.mxu0 0
    %1231 = vmatpush.bf16.msra.mxu0 0
    %1232 = vmatpush.bf16.msra.mxu0 0
    %1233 = vmatpush.bf16.msra.mxu0 %v647
    %1234 = vmatpush.bf16.msra.mxu0 %v646
    %1235 = vmatmul.bf16.gmra.mxu0 %v1225
    %v1236 = vpop.f32.mrf.mxu0
    %v1237 = vadd.f32 0.0, %v1236
    %v1238 = vpop.f32.mrf.mxu0
    %1239 = vdwg.mxu0
    %v1241 = vrot.slane %v1237, 2
    %v1242 = vrot.slane %v1237, 3
    %v1245 = vadd.f32 %v548, %v1241
    %v1246 = vadd.f32 %v550, %v1242
    %v1247 = vxor.u32 %v1245, 2147483648
    %v1248 = vxor.u32 %v1246, 2147483648
    %v1249 = vmul.f32 %v1247, 1.442695
    %v1250 = vpow.pop %v1249
    %v1251 = vmul.f32 %v1248, 1.442695
    %v1252 = vpow.pop %v1251
    %v1253 = vadd.f32 %v1250, 1.0
    %v1254 = vadd.f32 %v1252, 1.0
    %v1255 = vrcp.pop %v1253
    %v1256 = vmul.f32 %v1253, %v1255
    %v1257 = vsub.f32 1.0, %v1256
    %v1258 = vmul.f32 %v1255, %v1257
    %v1259 = vadd.f32 %v1255, %v1258
    %vm1260 = vweird.f32 %v1253
    %vm1261 = vweird.f32 %v1255
    %vm1262 = vmor %vm1260, %vm1261
    %v1263 = vsel %vm1262, %v1255, %v1259
    %v1264 = vand.u32 2147483647, %v1253
    %vm1265 = vcmp.eq.f32.partialorder %v1264, 8.507059e+37
    %v1266 = vand.u32 %v1253, 2147483648
    %v1267 = vor.u32 1.1754944e-38, %v1266
    %v1268 = vsel %vm1265, %v1267, %v1263
    %v1269 = vmul.f32 1.0, %v1268
    %v1270 = vrcp.pop %v1254
    %v1271 = vmul.f32 %v1254, %v1270
    %v1272 = vsub.f32 1.0, %v1271
    %v1273 = vmul.f32 %v1270, %v1272
    %v1274 = vadd.f32 %v1270, %v1273
    %vm1275 = vweird.f32 %v1254
    %vm1276 = vweird.f32 %v1270
    %vm1277 = vmor %vm1275, %vm1276
    %v1278 = vsel %vm1277, %v1270, %v1274
    %v1279 = vand.u32 2147483647, %v1254
    %vm1280 = vcmp.eq.f32.partialorder %v1279, 8.507059e+37
    %v1281 = vand.u32 %v1254, 2147483648
    %v1282 = vor.u32 1.1754944e-38, %v1281
    %v1283 = vsel %vm1280, %v1282, %v1278
    %v1284 = vmul.f32 1.0, %v1283
    %v1285 = vtanh.pop %v1245
    %v1286 = vtanh.pop %v1246
    %v1289 = vrot.slane %v1198, 7
    %v1290 = vrot.slane %v1199, 7
    %v1293 = vmul.f32 %v1269, %v1289
    %v1294 = vmul.f32 %v1284, %v1290
    %1297 = vrot.lane.b32.xlu0 %v1285, 64
    %v1298 = vpop.permute.xlu0 %1297
    %1299 = vrot.lane.b32.xlu0 %v1286, 64
    %v1300 = vpop.permute.xlu0 %1299
    %v1303 = vmul.f32 %v1269, %v1298
    %v1304 = vmul.f32 %v1284, %v1300
    %1307 = vrot.lane.b32.xlu0 %v1303, 32
    %v1308 = vpop.permute.xlu0 %1307
    %1309 = vrot.lane.b32.xlu0 %v1304, 32
    %v1310 = vpop.permute.xlu0 %1309
    %v1313 = vadd.f32 %v1293, %v1308
    %v1314 = vadd.f32 %v1294, %v1310
    %v1315 = vtanh.pop %v1313
    %v1316 = vtanh.pop %v1314
    %1319 = vrot.lane.b32.xlu0 %v1315, 64
    %v1320 = vpop.permute.xlu0 %1319
    %1321 = vrot.lane.b32.xlu0 %v1316, 64
    %v1322 = vpop.permute.xlu0 %1321
    %v1325 = vmul.f32 %v1269, %v1320
    %v1326 = vmul.f32 %v1284, %v1322
    %v1327 = vpack.c.bf16 %v1325, %v1325
    %v1328 = vpack.c.bf16 %v1326, %v1326
    %v1331 = vunpack.c.l.b16 %v1327
    %v1332 = vunpack.c.l.b16 %v1328
    %v1333 = vrot.slane %v1331, 6
    %v1334 = vrot.slane %v1332, 5
    %v1335 = vsel %vm633, %v1334, %v1333
    %v1336 = vpack.c.b16 %v1335, %v1335
    %1337 = vrot.lane.b32.xlu0 %v1336, 32
    %v1338 = vpop.permute.xlu0 %1337
    %v1340 = vsel %vm650, %v1338, 0
    %1342 = vmatpush.bf16.msra.mxu0 0
    %1343 = vmatpush.bf16.msra.mxu0 0
    %1344 = vmatpush.bf16.msra.mxu0 0
    %1345 = vmatpush.bf16.msra.mxu0 0
    %1346 = vmatpush.bf16.msra.mxu0 0
    %1347 = vmatpush.bf16.msra.mxu0 0
    %1348 = vmatpush.bf16.msra.mxu0 %v647
    %1349 = vmatpush.bf16.msra.mxu0 %v646
    %1350 = vmatmul.bf16.gmra.mxu0 %v1340
    %v1351 = vpop.f32.mrf.mxu0
    %v1352 = vadd.f32 0.0, %v1351
    %v1353 = vpop.f32.mrf.mxu0
    %1354 = vdwg.mxu0
    %v1356 = vrot.slane %v1352, 1
    %v1357 = vrot.slane %v1352, 2
    %v1360 = vadd.f32 %v548, %v1356
    %v1361 = vadd.f32 %v550, %v1357
    %v1362 = vxor.u32 %v1360, 2147483648
    %v1363 = vxor.u32 %v1361, 2147483648
    %v1364 = vmul.f32 %v1362, 1.442695
    %v1365 = vpow.pop %v1364
    %v1366 = vmul.f32 %v1363, 1.442695
    %v1367 = vpow.pop %v1366
    %v1368 = vadd.f32 %v1365, 1.0
    %v1369 = vadd.f32 %v1367, 1.0
    %v1370 = vrcp.pop %v1368
    %v1371 = vmul.f32 %v1368, %v1370
    %v1372 = vsub.f32 1.0, %v1371
    %v1373 = vmul.f32 %v1370, %v1372
    %v1374 = vadd.f32 %v1370, %v1373
    %vm1375 = vweird.f32 %v1368
    %vm1376 = vweird.f32 %v1370
    %vm1377 = vmor %vm1375, %vm1376
    %v1378 = vsel %vm1377, %v1370, %v1374
    %v1379 = vand.u32 2147483647, %v1368
    %vm1380 = vcmp.eq.f32.partialorder %v1379, 8.507059e+37
    %v1381 = vand.u32 %v1368, 2147483648
    %v1382 = vor.u32 1.1754944e-38, %v1381
    %v1383 = vsel %vm1380, %v1382, %v1378
    %v1384 = vmul.f32 1.0, %v1383
    %v1385 = vrcp.pop %v1369
    %v1386 = vmul.f32 %v1369, %v1385
    %v1387 = vsub.f32 1.0, %v1386
    %v1388 = vmul.f32 %v1385, %v1387
    %v1389 = vadd.f32 %v1385, %v1388
    %vm1390 = vweird.f32 %v1369
    %vm1391 = vweird.f32 %v1385
    %vm1392 = vmor %vm1390, %vm1391
    %v1393 = vsel %vm1392, %v1385, %v1389
    %v1394 = vand.u32 2147483647, %v1369
    %vm1395 = vcmp.eq.f32.partialorder %v1394, 8.507059e+37
    %v1396 = vand.u32 %v1369, 2147483648
    %v1397 = vor.u32 1.1754944e-38, %v1396
    %v1398 = vsel %vm1395, %v1397, %v1393
    %v1399 = vmul.f32 1.0, %v1398
    %v1400 = vtanh.pop %v1360
    %v1401 = vtanh.pop %v1361
    %v1404 = vrot.slane %v1313, 7
    %v1405 = vrot.slane %v1314, 7
    %v1408 = vmul.f32 %v1384, %v1404
    %v1409 = vmul.f32 %v1399, %v1405
    %1412 = vrot.lane.b32.xlu0 %v1400, 64
    %v1413 = vpop.permute.xlu0 %1412
    %1414 = vrot.lane.b32.xlu0 %v1401, 64
    %v1415 = vpop.permute.xlu0 %1414
    %v1418 = vmul.f32 %v1384, %v1413
    %v1419 = vmul.f32 %v1399, %v1415
    %1422 = vrot.lane.b32.xlu0 %v1418, 32
    %v1423 = vpop.permute.xlu0 %1422
    %1424 = vrot.lane.b32.xlu0 %v1419, 32
    %v1425 = vpop.permute.xlu0 %1424
    %v1428 = vadd.f32 %v1408, %v1423
    %v1429 = vadd.f32 %v1409, %v1425
    %v1430 = vtanh.pop %v1428
    %v1431 = vtanh.pop %v1429
    %1434 = vrot.lane.b32.xlu0 %v1430, 64
    %v1435 = vpop.permute.xlu0 %1434
    %1436 = vrot.lane.b32.xlu0 %v1431, 64
    %v1437 = vpop.permute.xlu0 %1436
    %v1440 = vmul.f32 %v1384, %v1435
    %v1441 = vmul.f32 %v1399, %v1437
    %v1442 = vpack.c.bf16 %v525, %v525
    %v1443 = vpack.c.bf16 %v526, %v526
    %v1444 = vperm.slane %v60, 0
    %v1447 = vunpack.c.l.b16 %v1442
    %v1448 = vunpack.c.l.b16 %v1443
    %v1449 = vrot.slane %v1447, 7
    %v1450 = vrot.slane %v1448, 6
    %v1451 = vsel %vm633, %v1450, %v1449
    %v1452 = vpack.c.b16 %v1451, %v1451
    %v1455 = vunpack.c.l.b16 %v74
    %v1456 = vunpack.c.l.b16 %v75
    %v1457 = vpack.c.b16 %v1456, %v1455
    %v1460 = vsel %vm472, %v1452, 0
    %1462 = vmatpush.bf16.msra.mxu0 0
    %1463 = vmatpush.bf16.msra.mxu0 0
    %1464 = vmatpush.bf16.msra.mxu0 0
    %1465 = vmatpush.bf16.msra.mxu0 0
    %1466 = vmatpush.bf16.msra.mxu0 0
    %1467 = vmatpush.bf16.msra.mxu0 0
    %1468 = vmatpush.bf16.msra.mxu0 0
    %1469 = vmatpush.bf16.msra.mxu0 %v1457
    %1470 = vmatmul.bf16.gmra.mxu0 %v1460
    %v1471 = vpop.f32.mrf.mxu0
    %v1472 = vadd.f32 %v1444, %v1471
    %v1473 = vpop.f32.mrf.mxu0
    %1474 = vdwg.mxu0
    %v1475 = vxor.u32 %v1472, 2147483648
    %v1476 = vmul.f32 %v1475, 1.442695
    %v1477 = vpow.pop %v1476
    %v1478 = vadd.f32 %v1477, 1.0
    %v1479 = vrcp.pop %v1478
    %v1480 = vmul.f32 %v1478, %v1479
    %v1481 = vsub.f32 1.0, %v1480
    %v1482 = vmul.f32 %v1479, %v1481
    %v1483 = vadd.f32 %v1479, %v1482
    %vm1484 = vweird.f32 %v1478
    %vm1485 = vweird.f32 %v1479
    %vm1486 = vmor %vm1484, %vm1485
    %v1487 = vsel %vm1486, %v1479, %v1483
    %v1488 = vand.u32 2147483647, %v1478
    %vm1489 = vcmp.eq.f32.partialorder %v1488, 8.507059e+37
    %v1490 = vand.u32 %v1478, 2147483648
    %v1491 = vor.u32 1.1754944e-38, %v1490
    %v1492 = vsel %vm1489, %v1491, %v1487
    %v1493 = vmul.f32 1.0, %v1492
    %v1494 = vtanh.pop %v1472
    %1496 = vrot.lane.b32.xlu0 %v1494, 64
    %v1497 = vpop.permute.xlu0 %1496
    %v1499 = vmul.f32 %v1493, %v1497
    %v1500 = vtanh.pop %v1499
    %1502 = vrot.lane.b32.xlu0 %v1500, 96
    %v1503 = vpop.permute.xlu0 %1502
    %v1505 = vmul.f32 %v1493, %v1503
    %v1506 = vld [vmem:[%s1] sm:$0x3]
    %v1507 = vpack.c.bf16 %v1506, %v1506
    %v1508 = vperm.slane %v61, 0
    %v1525 = vunpack.c.l.b16 %v76
    %v1526 = vunpack.c.l.b16 %v77
    %v1527 = vunpack.c.l.b16 %v78
    %v1528 = vunpack.c.l.b16 %v79
    %v1529 = vunpack.c.l.b16 %v80
    %v1530 = vunpack.c.l.b16 %v81
    %v1531 = vunpack.c.l.b16 %v82
    %v1532 = vunpack.c.l.b16 %v83
    %v1533 = vunpack.c.l.b16 %v84
    %v1534 = vunpack.c.l.b16 %v85
    %v1535 = vunpack.c.l.b16 %v86
    %v1536 = vunpack.c.l.b16 %v87
    %v1537 = vunpack.c.l.b16 %v88
    %v1538 = vunpack.c.l.b16 %v89
    %v1539 = vunpack.c.l.b16 %v90
    %v1540 = vunpack.c.l.b16 %v91
    %v1541 = vpack.c.b16 %v1526, %v1525
    %v1542 = vpack.c.b16 %v1528, %v1527
    %v1543 = vpack.c.b16 %v1530, %v1529
    %v1544 = vpack.c.b16 %v1532, %v1531
    %v1545 = vpack.c.b16 %v1534, %v1533
    %v1546 = vpack.c.b16 %v1536, %v1535
    %v1547 = vpack.c.b16 %v1538, %v1537
    %v1548 = vpack.c.b16 %v1540, %v1539
    %1557 = vmatpush.bf16.msra.mxu0 %v1548
    %1558 = vmatpush.bf16.msra.mxu0 %v1547
    %1559 = vmatpush.bf16.msra.mxu0 %v1546
    %1560 = vmatpush.bf16.msra.mxu0 %v1545
    %1561 = vmatpush.bf16.msra.mxu0 %v1544
    %1562 = vmatpush.bf16.msra.mxu0 %v1543
    %1563 = vmatpush.bf16.msra.mxu0 %v1542
    %1564 = vmatpush.bf16.msra.mxu0 %v1541
    %1565 = vmatmul.bf16.gmra.mxu0 %v1507
    %v1566 = vpop.f32.mrf.mxu0
    %v1567 = vadd.f32 %v1508, %v1566
    %v1568 = vpop.f32.mrf.mxu0
    %1569 = vdwg.mxu0
    %v1570 = vmax.f32 %v1567, 0.0
    %v1571 = vpack.c.bf16 %v1440, %v1440
    %v1572 = vpack.c.bf16 %v1441, %v1441
    %v1573 = vpack.c.bf16 %v1505, %v1505
    %1575 = vrot.lane.b32.xlu0 %v1573, 32
    %v1576 = vpop.permute.xlu0 %1575
    %v1581 = vunpack.c.l.b16 %v96
    %v1582 = vunpack.c.l.b16 %v97
    %v1583 = vunpack.c.l.b16 %v98
    %v1584 = vunpack.c.l.b16 %v99
    %v1585 = vpack.c.b16 %v1582, %v1581
    %v1586 = vpack.c.b16 %v1584, %v1583
    %v1590 = vsel %vm650, %v1576, 0
    %1592 = vmatpush.bf16.msra.mxu0 0
    %1593 = vmatpush.bf16.msra.mxu0 0
    %1594 = vmatpush.bf16.msra.mxu0 0
    %1595 = vmatpush.bf16.msra.mxu0 0
    %1596 = vmatpush.bf16.msra.mxu0 0
    %1597 = vmatpush.bf16.msra.mxu0 0
    %1598 = vmatpush.bf16.msra.mxu0 %v1586
    %1599 = vmatpush.bf16.msra.mxu0 %v1585
    %1600 = vmatmul.bf16.gmra.mxu0 %v1590
    %v1601 = vpop.f32.mrf.mxu0
    %v1602 = vadd.f32 0.0, %v1601
    %v1603 = vpop.f32.mrf.mxu0
    %1604 = vdwg.mxu0
    %v1607 = vunpack.c.l.b16 %v1571
    %v1608 = vunpack.c.l.b16 %v1572
    %v1609 = vrot.slane %v1607, 7
    %v1610 = vrot.slane %v1608, 6
    %v1611 = vsel %vm633, %v1610, %v1609
    %v1612 = vpack.c.b16 %v1611, %v1611
    %1613 = vrot.lane.b32.xlu0 %v1612, 32
    %v1614 = vpop.permute.xlu0 %1613
    %v1619 = vunpack.c.l.b16 %v92
    %v1620 = vunpack.c.l.b16 %v93
    %v1621 = vunpack.c.l.b16 %v94
    %v1622 = vunpack.c.l.b16 %v95
    %v1623 = vpack.c.b16 %v1620, %v1619
    %v1624 = vpack.c.b16 %v1622, %v1621
    %v1628 = vsel %vm650, %v1614, 0
    %1630 = vmatpush.bf16.msra.mxu0 0
    %1631 = vmatpush.bf16.msra.mxu0 0
    %1632 = vmatpush.bf16.msra.mxu0 0
    %1633 = vmatpush.bf16.msra.mxu0 0
    %1634 = vmatpush.bf16.msra.mxu0 0
    %1635 = vmatpush.bf16.msra.mxu0 0
    %1636 = vmatpush.bf16.msra.mxu0 %v1624
    %1637 = vmatpush.bf16.msra.mxu0 %v1623
    %1638 = vmatmul.bf16.gmra.mxu0 %v1628
    %v1639 = vpop.f32.mrf.mxu0
    %v1640 = vadd.f32 %v1602, %v1639
    %v1641 = vpop.f32.mrf.mxu0
    %1642 = vdwg.mxu0
    %v1643 = vpack.c.bf16 %v1570, %v1570
    %v1656 = vunpack.c.l.b16 %v100
    %v1657 = vunpack.c.l.b16 %v101
    %v1658 = vunpack.c.l.b16 %v102
    %v1659 = vunpack.c.l.b16 %v103
    %v1660 = vunpack.c.l.b16 %v104
    %v1661 = vunpack.c.l.b16 %v105
    %v1662 = vunpack.c.l.b16 %v106
    %v1663 = vunpack.c.l.b16 %v107
    %v1664 = vunpack.c.l.b16 %v108
    %v1665 = vunpack.c.l.b16 %v109
    %v1666 = vunpack.c.l.b16 %v110
    %v1667 = vunpack.c.l.b16 %v111
    %v1668 = vpack.c.b16 %v1657, %v1656
    %v1669 = vpack.c.b16 %v1659, %v1658
    %v1670 = vpack.c.b16 %v1661, %v1660
    %v1671 = vpack.c.b16 %v1663, %v1662
    %v1672 = vpack.c.b16 %v1665, %v1664
    %v1673 = vpack.c.b16 %v1667, %v1666
    %vm1680 = vcmask 785408
    %v1682 = vsel %vm1680, %v1643, 0
    %1684 = vmatpush.bf16.msra.mxu0 0
    %1685 = vmatpush.bf16.msra.mxu0 0
    %1686 = vmatpush.bf16.msra.mxu0 %v1673
    %1687 = vmatpush.bf16.msra.mxu0 %v1672
    %1688 = vmatpush.bf16.msra.mxu0 %v1671
    %1689 = vmatpush.bf16.msra.mxu0 %v1670
    %1690 = vmatpush.bf16.msra.mxu0 %v1669
    %1691 = vmatpush.bf16.msra.mxu0 %v1668
    %1692 = vmatmul.bf16.gmra.mxu0 %v1682
    %v1693 = vpop.f32.mrf.mxu0
    %v1694 = vadd.f32 0.0, %v1693
    %v1695 = vpop.f32.mrf.mxu0
    %1696 = vdwg.mxu0
    %v1697 = vadd.f32 %v1640, %v1694
    %v1698 = vperm.slane %v62, 0
    %v1699 = vadd.f32 %v1697, %v1698
    %v1700 = vmax.f32 %v1699, 0.0
    %v1701 = vperm.slane %v63, 0
    %v1703 = vsel %vm650, %v1700, 0
    %1705 = vmatpush.msra.mxu0 0.0
    %1706 = vmatpush.msra.mxu0 0.0
    %1707 = vmatpush.msra.mxu0 0.0
    %1708 = vmatpush.msra.mxu0 0.0
    %1709 = vmatpush.msra.mxu0 0.0
    %1710 = vmatpush.msra.mxu0 0.0
    %1711 = vmatpush.msra.mxu0 0.0
    %1712 = vmatpush.msra.mxu0 0.0
    %1713 = vmatpush.msra.mxu0 0.0
    %1714 = vmatpush.msra.mxu0 0.0
    %1715 = vmatpush.msra.mxu0 0.0
    %1716 = vmatpush.msra.mxu0 0.0
    %1717 = vmatpush.msra.mxu0 %v67
    %1718 = vmatpush.msra.mxu0 %v66
    %1719 = vmatpush.msra.mxu0 %v65
    %1720 = vmatpush.msra.mxu0 %v64
    %1721 = vmatmul.f32.gmra.mxu0 %v1703
    %v1722 = vpop.f32.mrf.mxu0
    %v1723 = vadd.f32 %v1701, %v1722
    %1724 = vdwg.mxu0
    %1725 = vst [vmem:[#allocation7] sm:$0x3] %v1723
    // Predicated region
    $region26: #{emotion_predict_forward.1} parent=1 // pred_check
      _
    $region27: #{emotion_predict_forward.1} parent=1 // pred_check_branch
      %1727 = sbr.rel (0) target = $region29
    $region28: #{emotion_predict_forward.1} parent=1 // pred_region
      %1729 = vsyncadd [#allocation4], 0
      %s1731 = sshll.u32 [#allocation7], 4
      %s1732 = int_to_ptr.vmem [resolvable:$true] %s1731
      %s1733 = sshll.u32 %s4, 4
      %s1734 = int_to_ptr.hbm [resolvable:$true] %s1733
      %1736 = dma.vmem_to_hbm [thread:$0]  %s1732, 32, %s1734, [#allocation4]
    $region29: #{emotion_predict_forward.1} parent=1 // pred_fallthru
      _
    // Predicated region
    $region30: #{emotion_predict_forward.1} parent=1 // pred_check
      _
    $region31: #{emotion_predict_forward.1} parent=1 // pred_check_branch
      %1738 = sbr.rel (0) target = $region33
    $region32: #{emotion_predict_forward.1} parent=1 // pred_region
      %1740 = dma.done [#allocation4], 32
    $region33: #{emotion_predict_forward.1} parent=1 // pred_fallthru
      _
    %1741 = vsyncpa [#allocation3], 1
    %1742 = vsyncpa [#allocation6], 1
    %1743 = vsyncpa [#allocation4], 1

</llo_original>
